<compile_context>
chip_gen: v6e
topology: v6e:2x2x1
jax: 0.10.0
libtpu: 0.0.40
codegen_flags: <defaults>
</compile_context>

<pallas_src>
import functools

import jax
import jax.numpy as jnp
from jax.experimental import pallas as pl
from jax.experimental.pallas import tpu as pltpu

_EPS = 1e-5
_TILE_M = 256          # rows per grid step; fits v7x scoped-VMEM comfortably
_LANE = 128            # lane width: pad channel / contraction dims to this


# ---------------------------------------------------------------------------
# small helpers
# ---------------------------------------------------------------------------
def _round_up(x, m):
    return (x + m - 1) // m * m


def _pad2d(a, rows, cols):
    r, c = a.shape
    return jnp.pad(a, ((0, rows - r), (0, cols - c)))


def _choose_tile_m(m, tile_m):
    tm = min(tile_m, _round_up(m, 8))
    mp = _round_up(m, tm)
    return tm, mp


# ---------------------------------------------------------------------------
# Pallas kernels
# ---------------------------------------------------------------------------
def _matmul_stats_kernel(p_ref, w_ref, raw_ref, stats_ref):
    """(TILE_M, Kp) @ (Kp, Cp) on the MXU + per-tile per-channel sum / sumsq."""
    acc = jnp.dot(p_ref[...], w_ref[...], preferred_element_type=jnp.float32)
    raw_ref[...] = acc.astype(raw_ref.dtype)
    # Per-tile BN partial statistics (kept in f32 to avoid cancellation issues).
    stats_ref[...] = jnp.zeros(stats_ref.shape, jnp.float32)
    stats_ref[0:1, :] = jnp.sum(acc, axis=0, keepdims=True)
    stats_ref[1:2, :] = jnp.sum(acc * acc, axis=0, keepdims=True)


def _scale_bias_act_kernel(raw_ref, sc_ref, bi_ref, o_ref, *, apply_relu):
    """out = relu?(raw * scale + bias) with folded BN scale/bias."""
    y = raw_ref[...].astype(jnp.float32) * sc_ref[...] + bi_ref[...]
    if apply_relu:
        y = jnp.maximum(y, 0.0)
    o_ref[...] = y.astype(o_ref.dtype)


def _bn_add_relu_kernel(raw_ref, sc_ref, bi_ref, res_ref, rsc_ref, rbi_ref, o_ref):
    """out = relu((raw*sc+bi) + (res*rsc+rbi)) — bn2, residual-BN, add, relu fused."""
    y = raw_ref[...].astype(jnp.float32) * sc_ref[...] + bi_ref[...]
    r = res_ref[...].astype(jnp.float32) * rsc_ref[...] + rbi_ref[...]
    o_ref[...] = jnp.maximum(y + r, 0.0).astype(o_ref.dtype)


# ---------------------------------------------------------------------------
# pallas_call wrappers
# ---------------------------------------------------------------------------
_PARALLEL = pltpu.CompilerParams(dimension_semantics=("parallel",))


def conv_matmul_stats(patches, w, *, compute_dtype, raw_dtype, tile_m=_TILE_M):
    """Tiled conv-as-matmul; returns raw conv output + per-channel sum / sumsq."""
    m, k = patches.shape
    k2, cout = w.shape
    assert k == k2
    kp = _round_up(k, _LANE)
    cp = _round_up(cout, _LANE)
    tm, mp = _choose_tile_m(m, tile_m)
    ntiles = mp // tm

    p = _pad2d(patches.astype(compute_dtype), mp, kp)      # zero rows/cols: no-op for stats
    wp = _pad2d(w.astype(compute_dtype), kp, cp)

    raw, stats = pl.pallas_call(
        _matmul_stats_kernel,
        out_shape=(
            jax.ShapeDtypeStruct((mp, cp), raw_dtype),
            jax.ShapeDtypeStruct((ntiles * 8, cp), jnp.float32),
        ),
        grid=(ntiles,),
        in_specs=[
            pl.BlockSpec((tm, kp), lambda i: (i, 0)),       # streamed patch rows
            pl.BlockSpec((kp, cp), lambda i: (0, 0)),       # weights (block-invariant)
        ],
        out_specs=(
            pl.BlockSpec((tm, cp), lambda i: (i, 0)),
            pl.BlockSpec((8, cp), lambda i: (i, 0)),
        ),
        compiler_params=_PARALLEL,
    )(p, wp)

    stats = stats.reshape(ntiles, 8, cp)
    ch_sum = jnp.sum(stats[:, 0, :], axis=0)
    ch_sumsq = jnp.sum(stats[:, 1, :], axis=0)
    return raw, ch_sum, ch_sumsq, tm


def _bn_fold(ch_sum, ch_sumsq, m_true, gamma, beta, cp):
    """Fold batch stats + affine params into a single per-channel scale/bias."""
    g = jnp.pad(gamma.astype(jnp.float32), (0, cp - gamma.shape[0]))
    b = jnp.pad(beta.astype(jnp.float32), (0, cp - beta.shape[0]))
    mean = ch_sum / m_true
    var = jnp.maximum(ch_sumsq / m_true - mean * mean, 0.0)
    scale = g * jax.lax.rsqrt(var + _EPS)
    bias = b - mean * scale
    return scale.reshape(1, cp), bias.reshape(1, cp)


def bn_apply(raw, scale, bias, *, apply_relu, tile_m, out_dtype):
    mp, cp = raw.shape
    ntiles = mp // tile_m
    tile = pl.BlockSpec((tile_m, cp), lambda i: (i, 0))
    vec = pl.BlockSpec((1, cp), lambda i: (0, 0))
    return pl.pallas_call(
        functools.partial(_scale_bias_act_kernel, apply_relu=apply_relu),
        out_shape=jax.ShapeDtypeStruct((mp, cp), out_dtype),
        grid=(ntiles,),
        in_specs=[tile, vec, vec],
        out_specs=tile,
        compiler_params=_PARALLEL,
    )(raw, scale, bias)


def bn_add_relu(raw, scale, bias, res, res_scale, res_bias, *, tile_m, out_dtype):
    mp, cp = raw.shape
    ntiles = mp // tile_m
    tile = pl.BlockSpec((tile_m, cp), lambda i: (i, 0))
    vec = pl.BlockSpec((1, cp), lambda i: (0, 0))
    return pl.pallas_call(
        _bn_add_relu_kernel,
        out_shape=jax.ShapeDtypeStruct((mp, cp), out_dtype),
        grid=(ntiles,),
        in_specs=[tile, vec, vec, tile, vec, vec],
        out_specs=tile,
        compiler_params=_PARALLEL,
    )(raw, scale, bias, res, res_scale, res_bias)


# ---------------------------------------------------------------------------
# Glue (plain JAX): im2col, layout conversion, parameter setup
# ---------------------------------------------------------------------------
def _im2col3x3(x_nhwc, stride):
    """3x3 conv, padding=1, given stride -> (N*Ho*Wo, 9*C) patch matrix."""
    n, h, w, c = x_nhwc.shape
    xp = jnp.pad(x_nhwc, ((0, 0), (1, 1), (1, 1), (0, 0)))
    ho = (h + 2 - 3) // stride + 1
    wo = (w + 2 - 3) // stride + 1
    cols = []
    for kh in range(3):
        for kw in range(3):
            patch = jax.lax.slice(
                xp,
                (0, kh, kw, 0),
                (n, kh + (ho - 1) * stride + 1, kw + (wo - 1) * stride + 1, c),
                (1, stride, stride, 1),
            )
            cols.append(patch)
    patches = jnp.concatenate(cols, axis=-1)  # (N, Ho, Wo, 9*C), taps outer / channels inner
    return patches.reshape(n * ho * wo, 9 * c), (n, ho, wo)


def basic_block_forward(x_nchw, params, *, stride=1, have_downsample=0,
                        compute_dtype=jnp.bfloat16, tile_m=_TILE_M):
    x = jnp.transpose(x_nchw, (0, 2, 3, 1)).astype(jnp.float32)   # NCHW -> NHWC
    n, h, w_dim, cin = x.shape
    planes = params["conv1_w"].shape[0]
    raw_dtype = compute_dtype        # dtype of HBM intermediates (bf16 in perf mode)

    # ---- conv1 (3x3, stride) + bn1 + relu -------------------------------------------------
    w1 = jnp.transpose(params["conv1_w"], (2, 3, 1, 0)).reshape(9 * cin, planes)
    p1, (_, ho, wo) = _im2col3x3(x.astype(compute_dtype), stride)
    m = n * ho * wo
    raw1, s1, q1, tm = conv_matmul_stats(
        p1, w1, compute_dtype=compute_dtype, raw_dtype=raw_dtype, tile_m=tile_m)
    cp = raw1.shape[1]
    sc1, bi1 = _bn_fold(s1, q1, m, params["bn1_g"], params["bn1_b"], cp)
    a1 = bn_apply(raw1, sc1, bi1, apply_relu=True, tile_m=tm, out_dtype=compute_dtype)
    a1 = a1[:m, :planes].reshape(n, ho, wo, planes)

    # ---- conv2 (3x3, stride 1); its bn2 is applied in the fused epilogue --------------------
    w2 = jnp.transpose(params["conv2_w"], (2, 3, 1, 0)).reshape(9 * planes, planes)
    p2, _ = _im2col3x3(a1, 1)
    raw2, s2, q2, tm2 = conv_matmul_stats(
        p2, w2, compute_dtype=compute_dtype, raw_dtype=raw_dtype, tile_m=tile_m)
    cp2 = raw2.shape[1]
    sc2, bi2 = _bn_fold(s2, q2, m, params["bn2_g"], params["bn2_b"], cp2)

    # ---- residual branch: raw values + folded per-channel scale/bias for the epilogue -------
    if have_downsample:
        xs = x[:, ::stride, ::stride, :].reshape(m, cin)            # 1x1 conv, stride, no pad
        wd = jnp.transpose(params["ds_w"][:, :, 0, 0], (1, 0))      # (Cin, planes)
        rawd, sd, qd, _ = conv_matmul_stats(
            xs, wd, compute_dtype=compute_dtype, raw_dtype=raw_dtype, tile_m=tile_m)
        assert rawd.shape == raw2.shape
        res_sc, res_bi = _bn_fold(sd, qd, m, params["ds_bn_g"], params["ds_bn_b"], cp2)
        res_raw = rawd
    else:
        if stride != 1 or cin != planes:
            raise ValueError("identity residual requires stride == 1 and inplanes == planes")
        res_raw = _pad2d(x.reshape(m, cin).astype(raw_dtype), raw2.shape[0], cp2)
        res_sc = jnp.ones((1, cp2), jnp.float32)
        res_bi = jnp.zeros((1, cp2), jnp.float32)

    # ---- bn2 + residual-bn + add + relu (single fused, tiled pass) --------------------------
    out = bn_add_relu(raw2, sc2, bi2, res_raw, res_sc, res_bi,
                      tile_m=tm2, out_dtype=jnp.float32)
    out = out[:m, :planes].reshape(n, ho, wo, planes)
    return jnp.transpose(out, (0, 3, 1, 2))                         # NHWC -> NCHW


def init_params(key, inplanes, planes, have_downsample):
    ks = jax.random.split(key, 9)
    params = {
        "conv1_w": 0.1 * jax.random.normal(ks[0], (planes, inplanes, 3, 3), jnp.float32),
        "bn1_g": 1.0 + 0.1 * jax.random.normal(ks[1], (planes,), jnp.float32),
        "bn1_b": 0.1 * jax.random.normal(ks[2], (planes,), jnp.float32),
        "conv2_w": 0.1 * jax.random.normal(ks[3], (planes, planes, 3, 3), jnp.float32),
        "bn2_g": 1.0 + 0.1 * jax.random.normal(ks[4], (planes,), jnp.float32),
        "bn2_b": 0.1 * jax.random.normal(ks[5], (planes,), jnp.float32),
    }
    if have_downsample:
        params["ds_w"] = 0.1 * jax.random.normal(ks[6], (planes, inplanes, 1, 1), jnp.float32)
        params["ds_bn_g"] = 1.0 + 0.1 * jax.random.normal(ks[7], (planes,), jnp.float32)
        params["ds_bn_b"] = 0.1 * jax.random.normal(ks[8], (planes,), jnp.float32)
    return params


# ---------------------------------------------------------------------------
# Pure-JAX reference (for correctness check only)
# ---------------------------------------------------------------------------
def _ref_forward(x_nchw, params, stride, have_downsample):
    def conv(x, w, s, pad):
        return jax.lax.conv_general_dilated(
            x, w, (s, s), [(pad, pad), (pad, pad)],
            dimension_numbers=("NCHW", "OIHW", "NCHW"))

    def bn(x, g, b):
        mean = jnp.mean(x, axis=(0, 2, 3), keepdims=True)
        var = jnp.mean(jnp.square(x - mean), axis=(0, 2, 3), keepdims=True)
        xhat = (x - mean) * jax.lax.rsqrt(var + _EPS)
        return xhat * g.reshape(1, -1, 1, 1) + b.reshape(1, -1, 1, 1)

    out = jax.nn.relu(bn(conv(x_nchw, params["conv1_w"], stride, 1),
                         params["bn1_g"], params["bn1_b"]))
    out = bn(conv(out, params["conv2_w"], 1, 1), params["bn2_g"], params["bn2_b"])
    if have_downsample:
        residual = bn(conv(x_nchw, params["ds_w"], stride, 0),
                      params["ds_bn_g"], params["ds_bn_b"])
    else:
        residual = x_nchw
    return jax.nn.relu(out + residual)


if __name__ == "__main__":
    key = jax.random.PRNGKey(0)
    kx, kp1, kp2 = jax.random.split(key, 3)
    x = jax.random.normal(kx, (2, 4, 16, 16), jnp.float32)

    # Config A: inplanes == planes, stride 1, identity residual.
    pA = init_params(kp1, 4, 4, 0)
    # Config B: channel expansion 4 -> 8, stride 2, downsample branch.
    pB = init_params(kp2, 4, 8, 1)

    forward = jax.jit(
        basic_block_forward,
        static_argnames=("stride", "have_downsample", "compute_dtype", "tile_m"))

    # Performance path: bf16 MXU inputs / intermediates (default).
    yA = forward(x, pA, stride=1, have_downsample=0)
    yB = forward(x, pB, stride=2, have_downsample=1)
    jax.block_until_ready((yA, yB))
    assert yA.shape == (2, 4, 16, 16)
    assert yB.shape == (2, 8, 8, 8)

    rA = _ref_forward(x, pA, 1, 0)
    rB = _ref_forward(x, pB, 2, 1)
    # bf16 mixed precision -> loose tolerance against the f32 reference.
    assert jnp.allclose(yA, rA, atol=1e-1, rtol=1e-1), float(jnp.max(jnp.abs(yA - rA)))
    assert jnp.allclose(yB, rB, atol=1e-1, rtol=1e-1), float(jnp.max(jnp.abs(yB - rB)))

    # Strict-precision path (f32 end-to-end) verifies the module semantics exactly.
    yA32 = forward(x, pA, stride=1, have_downsample=0, compute_dtype=jnp.float32)
    yB32 = forward(x, pB, stride=2, have_downsample=1, compute_dtype=jnp.float32)
    jax.block_until_ready((yA32, yB32))
    assert jnp.allclose(yA32, rA, atol=1e-4), float(jnp.max(jnp.abs(yA32 - rA)))
    assert jnp.allclose(yB32, rB, atol=1e-4), float(jnp.max(jnp.abs(yB32 - rB)))

    print("KERNEL_OK")
</pallas_src>

<mosaic_0001>
module attributes {stable_mosaic.version = 11 : i64} {
  func.func @_matmul_stats_kernel(%arg0: i32, %arg1: memref<256x128xbf16, #tpu.memory_space<vmem>>, %arg2: memref<128x128xbf16, #tpu.memory_space<vmem>>, %arg3: memref<256x128xbf16, #tpu.memory_space<vmem>>, %arg4: memref<8x128xf32, #tpu.memory_space<vmem>>) attributes {dimension_semantics = [#tpu.dimension_semantics<parallel>], iteration_bounds = array<i64: 2>, scalar_prefetch = 0 : i64, scratch_operands = 0 : i64, tpu.core_type = #tpu.core_type<tc>, window_params = [{transform_indices = @transform_0, window_bounds = array<i64: 256, 128>}, {pipeline_mode = #tpu.pipeline_mode<synchronous>, transform_indices = @transform_1, window_bounds = array<i64: 128, 128>}, {transform_indices = @transform_2, window_bounds = array<i64: 256, 128>}, {transform_indices = @transform_3, window_bounds = array<i64: 8, 128>}]} {
    %c0 = arith.constant 0 : index
    %c0_0 = arith.constant 0 : index
    %0 = vector.load %arg1[%c0, %c0_0] : memref<256x128xbf16, #tpu.memory_space<vmem>>, vector<256x128xbf16>
    %c0_1 = arith.constant 0 : index
    %c0_2 = arith.constant 0 : index
    %1 = vector.load %arg2[%c0_1, %c0_2] : memref<128x128xbf16, #tpu.memory_space<vmem>>, vector<128x128xbf16>
    %cst = arith.constant dense<0.000000e+00> : vector<256x128xf32>
    %2 = tpu.matmul %0, %1, %cst {dimension_numbers = #tpu.dot_dimension_numbers<[1], [0], [0], [1], [0, 0, 1, 1], [], []>} : vector<256x128xbf16>, vector<128x128xbf16>, vector<256x128xf32> -> vector<256x128xf32>
    %3 = arith.truncf %2 : vector<256x128xf32> to vector<256x128xbf16>
    %c0_3 = arith.constant 0 : index
    %c0_4 = arith.constant 0 : index
    %4 = vector.load %arg3[%c0_3, %c0_4] : memref<256x128xbf16, #tpu.memory_space<vmem>>, vector<256x128xbf16>
    tpu.vector_store %arg3[%c0_3, %c0_4], %3 {strides = array<i32>} : memref<256x128xbf16, #tpu.memory_space<vmem>>, vector<256x128xbf16>,
    %cst_5 = arith.constant 0.000000e+00 : f32
    %5 = vector.broadcast %cst_5 : f32 to vector<8x128xf32>
    %c0_6 = arith.constant 0 : index
    %c0_7 = arith.constant 0 : index
    %6 = vector.load %arg4[%c0_6, %c0_7] : memref<8x128xf32, #tpu.memory_space<vmem>>, vector<8x128xf32>
    tpu.vector_store %arg4[%c0_6, %c0_7], %5 {strides = array<i32>} : memref<8x128xf32, #tpu.memory_space<vmem>>, vector<8x128xf32>,
    %cst_8 = arith.constant dense<0.000000e+00> : vector<128xf32>
    %7 = vector.multi_reduction <add>, %2, %cst_8 [0] : vector<256x128xf32> to vector<128xf32>
    %8 = vector.shape_cast %7 : vector<128xf32> to vector<1x128xf32>
    %c0_9 = arith.constant 0 : index
    %c0_10 = arith.constant 0 : index
    %9 = vector.load %arg4[%c0_9, %c0_10] : memref<8x128xf32, #tpu.memory_space<vmem>>, vector<1x128xf32>
    tpu.vector_store %arg4[%c0_9, %c0_10], %8 {strides = array<i32>} : memref<8x128xf32, #tpu.memory_space<vmem>>, vector<1x128xf32>,
    %10 = arith.mulf %2, %2 : vector<256x128xf32>
    %cst_11 = arith.constant dense<0.000000e+00> : vector<128xf32>
    %11 = vector.multi_reduction <add>, %10, %cst_11 [0] : vector<256x128xf32> to vector<128xf32>
    %12 = vector.shape_cast %11 : vector<128xf32> to vector<1x128xf32>
    %c1 = arith.constant 1 : index
    %c0_12 = arith.constant 0 : index
    %13 = vector.load %arg4[%c1, %c0_12] : memref<8x128xf32, #tpu.memory_space<vmem>>, vector<1x128xf32>
    tpu.vector_store %arg4[%c1, %c0_12], %12 {strides = array<i32>} : memref<8x128xf32, #tpu.memory_space<vmem>>, vector<1x128xf32>,
    return
  }
  func.func @transform_0(%arg0: i32) -> (i32, i32) {
    %c0_i32 = arith.constant 0 : i32
    %c0_i32_0 = arith.constant 0 : i32
    return %arg0, %c0_i32 : i32, i32
  }
  func.func @transform_1(%arg0: i32) -> (i32, i32) {
    %c0_i32 = arith.constant 0 : i32
    %c0_i32_0 = arith.constant 0 : i32
    %c0_i32_1 = arith.constant 0 : i32
    return %c0_i32, %c0_i32_0 : i32, i32
  }
  func.func @transform_2(%arg0: i32) -> (i32, i32) {
    %c0_i32 = arith.constant 0 : i32
    %c0_i32_0 = arith.constant 0 : i32
    return %arg0, %c0_i32 : i32, i32
  }
  func.func @transform_3(%arg0: i32) -> (i32, i32) {
    %c0_i32 = arith.constant 0 : i32
    %c0_i32_0 = arith.constant 0 : i32
    return %arg0, %c0_i32 : i32, i32
  }
}

module attributes {stable_mosaic.version = 11 : i64} {
  func.func @_scale_bias_act_kernel(%arg0: i32, %arg1: memref<256x128xbf16, #tpu.memory_space<vmem>>, %arg2: memref<1x128xf32, #tpu.memory_space<vmem>>, %arg3: memref<1x128xf32, #tpu.memory_space<vmem>>, %arg4: memref<256x128xbf16, #tpu.memory_space<vmem>>) attributes {dimension_semantics = [#tpu.dimension_semantics<parallel>], iteration_bounds = array<i64: 2>, scalar_prefetch = 0 : i64, scratch_operands = 0 : i64, tpu.core_type = #tpu.core_type<tc>, window_params = [{transform_indices = @transform_0, window_bounds = array<i64: 256, 128>}, {pipeline_mode = #tpu.pipeline_mode<synchronous>, transform_indices = @transform_1, window_bounds = array<i64: 1, 128>}, {pipeline_mode = #tpu.pipeline_mode<synchronous>, transform_indices = @transform_2, window_bounds = array<i64: 1, 128>}, {transform_indices = @transform_3, window_bounds = array<i64: 256, 128>}]} {
    %c0 = arith.constant 0 : index
    %c0_0 = arith.constant 0 : index
    %0 = vector.load %arg1[%c0, %c0_0] : memref<256x128xbf16, #tpu.memory_space<vmem>>, vector<256x128xbf16>
    %1 = arith.extf %0 : vector<256x128xbf16> to vector<256x128xf32>
    %c0_1 = arith.constant 0 : index
    %c0_2 = arith.constant 0 : index
    %2 = vector.load %arg2[%c0_1, %c0_2] : memref<1x128xf32, #tpu.memory_space<vmem>>, vector<1x128xf32>
    %3 = vector.broadcast %2 : vector<1x128xf32> to vector<256x128xf32>
    %4 = arith.mulf %1, %3 : vector<256x128xf32>
    %c0_3 = arith.constant 0 : index
    %c0_4 = arith.constant 0 : index
    %5 = vector.load %arg3[%c0_3, %c0_4] : memref<1x128xf32, #tpu.memory_space<vmem>>, vector<1x128xf32>
    %6 = vector.broadcast %5 : vector<1x128xf32> to vector<256x128xf32>
    %7 = arith.addf %4, %6 : vector<256x128xf32>
    %cst = arith.constant 0.000000e+00 : f32
    %8 = vector.broadcast %cst : f32 to vector<256x128xf32>
    %9 = arith.maximumf %7, %8 : vector<256x128xf32>
    %10 = arith.truncf %9 : vector<256x128xf32> to vector<256x128xbf16>
    %c0_5 = arith.constant 0 : index
    %c0_6 = arith.constant 0 : index
    %11 = vector.load %arg4[%c0_5, %c0_6] : memref<256x128xbf16, #tpu.memory_space<vmem>>, vector<256x128xbf16>
    tpu.vector_store %arg4[%c0_5, %c0_6], %10 {strides = array<i32>} : memref<256x128xbf16, #tpu.memory_space<vmem>>, vector<256x128xbf16>,
    return
  }
  func.func @transform_0(%arg0: i32) -> (i32, i32) {
    %c0_i32 = arith.constant 0 : i32
    %c0_i32_0 = arith.constant 0 : i32
    return %arg0, %c0_i32 : i32, i32
  }
  func.func @transform_1(%arg0: i32) -> (i32, i32) {
    %c0_i32 = arith.constant 0 : i32
    %c0_i32_0 = arith.constant 0 : i32
    %c0_i32_1 = arith.constant 0 : i32
    return %c0_i32, %c0_i32_0 : i32, i32
  }
  func.func @transform_2(%arg0: i32) -> (i32, i32) {
    %c0_i32 = arith.constant 0 : i32
    %c0_i32_0 = arith.constant 0 : i32
    %c0_i32_1 = arith.constant 0 : i32
    return %c0_i32, %c0_i32_0 : i32, i32
  }
  func.func @transform_3(%arg0: i32) -> (i32, i32) {
    %c0_i32 = arith.constant 0 : i32
    %c0_i32_0 = arith.constant 0 : i32
    return %arg0, %c0_i32 : i32, i32
  }
}

module attributes {stable_mosaic.version = 11 : i64} {
  func.func @_bn_add_relu_kernel(%arg0: i32, %arg1: memref<256x128xbf16, #tpu.memory_space<vmem>>, %arg2: memref<1x128xf32, #tpu.memory_space<vmem>>, %arg3: memref<1x128xf32, #tpu.memory_space<vmem>>, %arg4: memref<256x128xbf16, #tpu.memory_space<vmem>>, %arg5: memref<1x128xf32, #tpu.memory_space<vmem>>, %arg6: memref<1x128xf32, #tpu.memory_space<vmem>>, %arg7: memref<256x128xf32, #tpu.memory_space<vmem>>) attributes {dimension_semantics = [#tpu.dimension_semantics<parallel>], iteration_bounds = array<i64: 2>, scalar_prefetch = 0 : i64, scratch_operands = 0 : i64, tpu.core_type = #tpu.core_type<tc>, window_params = [{transform_indices = @transform_0, window_bounds = array<i64: 256, 128>}, {pipeline_mode = #tpu.pipeline_mode<synchronous>, transform_indices = @transform_1, window_bounds = array<i64: 1, 128>}, {pipeline_mode = #tpu.pipeline_mode<synchronous>, transform_indices = @transform_2, window_bounds = array<i64: 1, 128>}, {transform_indices = @transform_3, window_bounds = array<i64: 256, 128>}, {pipeline_mode = #tpu.pipeline_mode<synchronous>, transform_indices = @transform_4, window_bounds = array<i64: 1, 128>}, {pipeline_mode = #tpu.pipeline_mode<synchronous>, transform_indices = @transform_5, window_bounds = array<i64: 1, 128>}, {transform_indices = @transform_6, window_bounds = array<i64: 256, 128>}]} {
    %c0 = arith.constant 0 : index
    %c0_0 = arith.constant 0 : index
    %0 = vector.load %arg1[%c0, %c0_0] : memref<256x128xbf16, #tpu.memory_space<vmem>>, vector<256x128xbf16>
    %1 = arith.extf %0 : vector<256x128xbf16> to vector<256x128xf32>
    %c0_1 = arith.constant 0 : index
    %c0_2 = arith.constant 0 : index
    %2 = vector.load %arg2[%c0_1, %c0_2] : memref<1x128xf32, #tpu.memory_space<vmem>>, vector<1x128xf32>
    %3 = vector.broadcast %2 : vector<1x128xf32> to vector<256x128xf32>
    %4 = arith.mulf %1, %3 : vector<256x128xf32>
    %c0_3 = arith.constant 0 : index
    %c0_4 = arith.constant 0 : index
    %5 = vector.load %arg3[%c0_3, %c0_4] : memref<1x128xf32, #tpu.memory_space<vmem>>, vector<1x128xf32>
    %6 = vector.broadcast %5 : vector<1x128xf32> to vector<256x128xf32>
    %7 = arith.addf %4, %6 : vector<256x128xf32>
    %c0_5 = arith.constant 0 : index
    %c0_6 = arith.constant 0 : index
    %8 = vector.load %arg4[%c0_5, %c0_6] : memref<256x128xbf16, #tpu.memory_space<vmem>>, vector<256x128xbf16>
    %9 = arith.extf %8 : vector<256x128xbf16> to vector<256x128xf32>
    %c0_7 = arith.constant 0 : index
    %c0_8 = arith.constant 0 : index
    %10 = vector.load %arg5[%c0_7, %c0_8] : memref<1x128xf32, #tpu.memory_space<vmem>>, vector<1x128xf32>
    %11 = vector.broadcast %10 : vector<1x128xf32> to vector<256x128xf32>
    %12 = arith.mulf %9, %11 : vector<256x128xf32>
    %c0_9 = arith.constant 0 : index
    %c0_10 = arith.constant 0 : index
    %13 = vector.load %arg6[%c0_9, %c0_10] : memref<1x128xf32, #tpu.memory_space<vmem>>, vector<1x128xf32>
    %14 = vector.broadcast %13 : vector<1x128xf32> to vector<256x128xf32>
    %15 = arith.addf %12, %14 : vector<256x128xf32>
    %16 = arith.addf %7, %15 : vector<256x128xf32>
    %cst = arith.constant 0.000000e+00 : f32
    %17 = vector.broadcast %cst : f32 to vector<256x128xf32>
    %18 = arith.maximumf %16, %17 : vector<256x128xf32>
    %c0_11 = arith.constant 0 : index
    %c0_12 = arith.constant 0 : index
    %19 = vector.load %arg7[%c0_11, %c0_12] : memref<256x128xf32, #tpu.memory_space<vmem>>, vector<256x128xf32>
    tpu.vector_store %arg7[%c0_11, %c0_12], %18 {strides = array<i32>} : memref<256x128xf32, #tpu.memory_space<vmem>>, vector<256x128xf32>,
    return
  }
  func.func @transform_0(%arg0: i32) -> (i32, i32) {
    %c0_i32 = arith.constant 0 : i32
    %c0_i32_0 = arith.constant 0 : i32
    return %arg0, %c0_i32 : i32, i32
  }
  func.func @transform_1(%arg0: i32) -> (i32, i32) {
    %c0_i32 = arith.constant 0 : i32
    %c0_i32_0 = arith.constant 0 : i32
    %c0_i32_1 = arith.constant 0 : i32
    return %c0_i32, %c0_i32_0 : i32, i32
  }
  func.func @transform_2(%arg0: i32) -> (i32, i32) {
    %c0_i32 = arith.constant 0 : i32
    %c0_i32_0 = arith.constant 0 : i32
    %c0_i32_1 = arith.constant 0 : i32
    return %c0_i32, %c0_i32_0 : i32, i32
  }
  func.func @transform_3(%arg0: i32) -> (i32, i32) {
    %c0_i32 = arith.constant 0 : i32
    %c0_i32_0 = arith.constant 0 : i32
    return %arg0, %c0_i32 : i32, i32
  }
  func.func @transform_4(%arg0: i32) -> (i32, i32) {
    %c0_i32 = arith.constant 0 : i32
    %c0_i32_0 = arith.constant 0 : i32
    %c0_i32_1 = arith.constant 0 : i32
    return %c0_i32, %c0_i32_0 : i32, i32
  }
  func.func @transform_5(%arg0: i32) -> (i32, i32) {
    %c0_i32 = arith.constant 0 : i32
    %c0_i32_0 = arith.constant 0 : i32
    %c0_i32_1 = arith.constant 0 : i32
    return %c0_i32, %c0_i32_0 : i32, i32
  }
  func.func @transform_6(%arg0: i32) -> (i32, i32) {
    %c0_i32 = arith.constant 0 : i32
    %c0_i32_0 = arith.constant 0 : i32
    return %arg0, %c0_i32 : i32, i32
  }
}

</mosaic_0001>

<llo_original>
// kernel: basic_block_forward.5
$region0: #{basic_block_forward.5}
  #allocation0 [shape = 'u32[]', space=smem, size = 0x4, offset = 0x4, fixed_abs, tag = 'smem constant byte address 0x4 - core index']
  #allocation1 [shape = 'u32[144,128]{1,0:T(1,128)}', space=vmem, size = 0x12000, scoped, tag = 'internal scratch']
  %s0 = inlined_call_operand.vmem [shape: bf16[512,128], index: 0, kind: input, shape index: {}]
  %s1 = inlined_call_operand.vmem [shape: f32[1,128], index: 1, kind: input, shape index: {}]
  %s2 = inlined_call_operand.vmem [shape: f32[1,128], index: 2, kind: input, shape index: {}]
  %s3 = inlined_call_operand.vmem [shape: bf16[512,128], index: 3, kind: output, shape index: {}]
  %s4 = sld [smem:[#allocation0]]
  $region45: #{basic_block_forward.5} parent=0
    _
  %s6 = ssub.s32 1, %s4
  %s7 = scalar_select 0, %s6, %s4
  loop: start=0, step=1, limit=4
  $region2: #{basic_block_forward.5} parent=0 // loop_pre_header
    _
  $region3: #{basic_block_forward.5} parent=0 // loop_header
    %s9 = sphi 0, %s13
    %p10 = scmp.ge.s32.totalorder %s9, 4
    %s19 = sphi 0, %s21
    %s22 = sphi 0, %s19
    %s23 = sphi 0, %s22
    %s39 = sphi 0, %s23
    %s43 = sphi 0, %s43
    %s45 = sphi 0, %s43
    %s46 = sphi 0, %s45
    %s60 = sphi 0, %s46
    %s64 = sphi 0, %s64
    %s66 = sphi 0, %s64
    %s67 = sphi 0, %s66
    %s81 = sphi 0, %s67
    %s87 = sphi 0, %s89
    %s90 = sphi 0, %s87
    %s91 = sphi 0, %s90
    %s107 = sphi 0, %s91
  $region4: #{basic_block_forward.5} parent=0 // loop_header_branch
    %12 = sbr.rel (%p10) target = $region8
  $region5: #{basic_block_forward.5} parent=0 // loop_body
    %s14 = ssub.s32 %s9, 1
    %s15 = ssub.s32 %s9, 2
    %s16 = sadd.s32 %s9, 1
    %s17 = ssub.s32 %s9, %s16
    %p18 = scmp.eq.s32.totalorder %s17, 0
    %s20 = sadd.s32 %s19, 1
    %s21 = scalar_select %p18, %s19, %s20
    %p24 = pneg %p18
    %p25 = scmp.eq.s32.totalorder %s9, 1
    %p26 = por %p24, %p25
    %p27 = scmp.ne.s32.totalorder %s19, %s22
    %p28 = scmp.eq.s32.totalorder %s9, 0
    %p29 = por %p27, %p28
    %p30 = scmp.ne.s32.totalorder %s19, %s22
    %p31 = scmp.eq.s32.totalorder %s14, 1
    %p32 = por %p30, %p31
    %p33 = scmp.ne.s32.totalorder %s22, %s23
    %p34 = scmp.eq.s32.totalorder %s14, 0
    %p35 = por %p33, %p34
    %p36 = scmp.ne.s32.totalorder %s22, %s23
    %p37 = scmp.eq.s32.totalorder %s15, 1
    %p38 = por %p36, %p37
    %p40 = scmp.ne.s32.totalorder %s23, %s39
    %p41 = scmp.eq.s32.totalorder %s15, 0
    %p42 = por %p40, %p41
    %s44 = sadd.s32 %s43, 1
    %p47 = scmp.eq.s32.totalorder %s9, 1
    %p48 = scmp.ne.s32.totalorder %s43, %s45
    %p49 = scmp.eq.s32.totalorder %s9, 0
    %p50 = por %p48, %p49
    %p51 = scmp.ne.s32.totalorder %s43, %s45
    %p52 = scmp.eq.s32.totalorder %s14, 1
    %p53 = por %p51, %p52
    %p54 = scmp.ne.s32.totalorder %s45, %s46
    %p55 = scmp.eq.s32.totalorder %s14, 0
    %p56 = por %p54, %p55
    %p57 = scmp.ne.s32.totalorder %s45, %s46
    %p58 = scmp.eq.s32.totalorder %s15, 1
    %p59 = por %p57, %p58
    %p61 = scmp.ne.s32.totalorder %s46, %s60
    %p62 = scmp.eq.s32.totalorder %s15, 0
    %p63 = por %p61, %p62
    %s65 = sadd.s32 %s64, 1
    %p68 = scmp.eq.s32.totalorder %s9, 1
    %p69 = scmp.ne.s32.totalorder %s64, %s66
    %p70 = scmp.eq.s32.totalorder %s9, 0
    %p71 = por %p69, %p70
    %p72 = scmp.ne.s32.totalorder %s64, %s66
    %p73 = scmp.eq.s32.totalorder %s14, 1
    %p74 = por %p72, %p73
    %p75 = scmp.ne.s32.totalorder %s66, %s67
    %p76 = scmp.eq.s32.totalorder %s14, 0
    %p77 = por %p75, %p76
    %p78 = scmp.ne.s32.totalorder %s66, %s67
    %p79 = scmp.eq.s32.totalorder %s15, 1
    %p80 = por %p78, %p79
    %p82 = scmp.ne.s32.totalorder %s67, %s81
    %p83 = scmp.eq.s32.totalorder %s15, 0
    %p84 = por %p82, %p83
    %s85 = ssub.s32 %s9, %s16
    %p86 = scmp.eq.s32.totalorder %s85, 0
    %s88 = sadd.s32 %s87, 1
    %s89 = scalar_select %p86, %s87, %s88
    %p92 = pneg %p86
    %p93 = scmp.eq.s32.totalorder %s9, 1
    %p94 = por %p92, %p93
    %p95 = scmp.ne.s32.totalorder %s87, %s90
    %p96 = scmp.eq.s32.totalorder %s9, 0
    %p97 = por %p95, %p96
    %p98 = scmp.ne.s32.totalorder %s87, %s90
    %p99 = scmp.eq.s32.totalorder %s14, 1
    %p100 = por %p98, %p99
    %p101 = scmp.ne.s32.totalorder %s90, %s91
    %p102 = scmp.eq.s32.totalorder %s14, 0
    %p103 = por %p101, %p102
    %p104 = scmp.ne.s32.totalorder %s90, %s91
    %p105 = scmp.eq.s32.totalorder %s15, 1
    %p106 = por %p104, %p105
    %p108 = scmp.ne.s32.totalorder %s91, %s107
    %p109 = scmp.eq.s32.totalorder %s15, 0
    %p110 = por %p108, %p109
    %p111 = scmp.le.s32.totalorder 1, %s9
    %p112 = scmp.lt.s32.totalorder %s9, 3
    %p113 = pnand %p111, %p112
    %p114 = pneg %p113
    // Predicated region
    $region9: #{basic_block_forward.5} parent=5 // pred_check
      _
    $region10: #{basic_block_forward.5} parent=5 // pred_check_branch
      %116 = sbr.rel (%p113) target = $region12
    $region11: #{basic_block_forward.5} parent=5 // pred_region
      %s117 = ssub.s32 %s9, 1
      // Predicated region
      $region13: #{basic_block_forward.5} parent=11 // pred_check
        %p118 = pneg %p56
      $region14: #{basic_block_forward.5} parent=11 // pred_check_branch
        %120 = sbr.rel (%p118) target = $region16
      $region15: #{basic_block_forward.5} parent=11 // pred_region
        _
      $region16: #{basic_block_forward.5} parent=11 // pred_fallthru
        _
      // Predicated region
      $region17: #{basic_block_forward.5} parent=11 // pred_check
        %p121 = pneg %p77
      $region18: #{basic_block_forward.5} parent=11 // pred_check_branch
        %123 = sbr.rel (%p121) target = $region20
      $region19: #{basic_block_forward.5} parent=11 // pred_region
        _
      $region20: #{basic_block_forward.5} parent=11 // pred_fallthru
        _
    $region12: #{basic_block_forward.5} parent=5 // pred_fallthru
      _
    %p124 = scmp.lt.s32.totalorder %s9, 2
    // Predicated region
    $region21: #{basic_block_forward.5} parent=5 // pred_check
      %p125 = pneg %p124
    $region22: #{basic_block_forward.5} parent=5 // pred_check_branch
      %127 = sbr.rel (%p125) target = $region24
    $region23: #{basic_block_forward.5} parent=5 // pred_region
      // Predicated region
      $region25: #{basic_block_forward.5} parent=23 // pred_check
        %p128 = pneg %p29
      $region26: #{basic_block_forward.5} parent=23 // pred_check_branch
        %130 = sbr.rel (%p128) target = $region28
      $region27: #{basic_block_forward.5} parent=23 // pred_region
        %s131 = smul.u32 32, %s9
        %p132 = scmp.lt.s32.totalorder %s131, 63
        %s133 = scalar_select %p132, %s131, 63
        %s134 = smul.addr %s133, 4
        %s135 = scalar_lea.vmem %s0, %s134
        %s136 = smul.u32 32, %s9
      $region28: #{basic_block_forward.5} parent=23 // pred_fallthru
        _
    $region24: #{basic_block_forward.5} parent=5 // pred_fallthru
      _
    %p137 = scmp.le.s32.totalorder 1, %s9
    %p138 = scmp.lt.s32.totalorder %s9, 3
    %p139 = pnand %p137, %p138
    %p140 = pneg %p139
    // Predicated region
    $region29: #{basic_block_forward.5} parent=5 // pred_check
      _
    $region30: #{basic_block_forward.5} parent=5 // pred_check_branch
      %142 = sbr.rel (%p139) target = $region32
    $region31: #{basic_block_forward.5} parent=5 // pred_region
      %s143 = ssub.s32 %s9, 1
      %s144 = smul.u32 32, %s14
      %p145 = scmp.lt.s32.totalorder %s144, 63
      %s146 = scalar_select %p145, %s144, 63
      %s147 = smul.addr %s146, 4
      %s148 = scalar_lea.vmem %s0, %s147
      %p149 = pneg %p35
      %p150 = pneg %p32
      %p151 = pneg %p56
      %p152 = pneg %p53
      %p153 = pneg %p77
      %p154 = pneg %p74
      %p155 = pneg %p103
      %p156 = pneg %p100
      %s157 = smul.u32 32, %s14
      %p158 = scmp.lt.s32.totalorder %s157, 63
      %s159 = scalar_select %p158, %s157, 63
      %s160 = smul.addr %s159, 4
      %s161 = scalar_lea.vmem %s3, %s160
      %s162 = smul.u32 32, %s14
      %p163 = scmp.lt.s32.totalorder %s162, 63
      %s164 = scalar_select %p163, %s162, 63
      %s165 = smul.addr %s164, 4
      %s166 = scalar_lea.vmem %s0, %s165
      %s167 = smul.u32 32, %s14
      %s168 = smul.u32 32, %s14
      %p169 = scmp.lt.s32.totalorder %s168, 63
      %s170 = scalar_select %p169, %s168, 63
      %s171 = smul.addr %s170, 4
      %s172 = scalar_lea.vmem %s3, %s171
      %s173 = smul.u32 32, %s14
      %v174 = vld [vmem:[%s166] sm:$0xf]
      %v175 = vld [vmem:[%s166 + $0x4] sm:$0xf]
      %v176 = vld [vmem:[%s166 + $0x8] sm:$0xf]
      %v177 = vld [vmem:[%s166 + $0xc] sm:$0xf]
      %v178 = vld [vmem:[%s166 + $0x10] sm:$0xf]
      %v179 = vld [vmem:[%s166 + $0x14] sm:$0xf]
      %v180 = vld [vmem:[%s166 + $0x18] sm:$0xf]
      %v181 = vld [vmem:[%s166 + $0x1c] sm:$0xf]
      %v182 = vld [vmem:[%s166 + $0x20] sm:$0xf]
      %v183 = vld [vmem:[%s166 + $0x24] sm:$0xf]
      %v184 = vld [vmem:[%s166 + $0x28] sm:$0xf]
      %v185 = vld [vmem:[%s166 + $0x2c] sm:$0xf]
      %v186 = vld [vmem:[%s166 + $0x30] sm:$0xf]
      %v187 = vld [vmem:[%s166 + $0x34] sm:$0xf]
      %v188 = vld [vmem:[%s166 + $0x38] sm:$0xf]
      %v189 = vld [vmem:[%s166 + $0x3c] sm:$0xf]
      %v190 = vld [vmem:[%s166 + $0x40] sm:$0xf]
      %v191 = vld [vmem:[%s166 + $0x44] sm:$0xf]
      %v192 = vld [vmem:[%s166 + $0x48] sm:$0xf]
      %v193 = vld [vmem:[%s166 + $0x4c] sm:$0xf]
      %v194 = vld [vmem:[%s166 + $0x50] sm:$0xf]
      %v195 = vld [vmem:[%s166 + $0x54] sm:$0xf]
      %v196 = vld [vmem:[%s166 + $0x58] sm:$0xf]
      %v197 = vld [vmem:[%s166 + $0x5c] sm:$0xf]
      %v198 = vld [vmem:[%s166 + $0x60] sm:$0xf]
      %v199 = vld [vmem:[%s166 + $0x64] sm:$0xf]
      %v200 = vld [vmem:[%s166 + $0x68] sm:$0xf]
      %v201 = vld [vmem:[%s166 + $0x6c] sm:$0xf]
      %v202 = vld [vmem:[%s166 + $0x70] sm:$0xf]
      %v203 = vld [vmem:[%s166 + $0x74] sm:$0xf]
      %v204 = vld [vmem:[%s166 + $0x78] sm:$0xf]
      %v205 = vld [vmem:[%s166 + $0x7c] sm:$0xf]
      %v206 = vunpack.c.l.bf16 %v174
      %v207 = vunpack.c.l.bf16 %v175
      %v208 = vunpack.c.l.bf16 %v176
      %v209 = vunpack.c.l.bf16 %v177
      %v210 = vunpack.c.l.bf16 %v178
      %v211 = vunpack.c.l.bf16 %v179
      %v212 = vunpack.c.l.bf16 %v180
      %v213 = vunpack.c.l.bf16 %v181
      %v214 = vunpack.c.l.bf16 %v182
      %v215 = vunpack.c.l.bf16 %v183
      %v216 = vunpack.c.l.bf16 %v184
      %v217 = vunpack.c.l.bf16 %v185
      %v218 = vunpack.c.l.bf16 %v186
      %v219 = vunpack.c.l.bf16 %v187
      %v220 = vunpack.c.l.bf16 %v188
      %v221 = vunpack.c.l.bf16 %v189
      %v222 = vunpack.c.l.bf16 %v190
      %v223 = vunpack.c.l.bf16 %v191
      %v224 = vunpack.c.l.bf16 %v192
      %v225 = vunpack.c.l.bf16 %v193
      %v226 = vunpack.c.l.bf16 %v194
      %v227 = vunpack.c.l.bf16 %v195
      %v228 = vunpack.c.l.bf16 %v196
      %v229 = vunpack.c.l.bf16 %v197
      %v230 = vunpack.c.l.bf16 %v198
      %v231 = vunpack.c.l.bf16 %v199
      %v232 = vunpack.c.l.bf16 %v200
      %v233 = vunpack.c.l.bf16 %v201
      %v234 = vunpack.c.l.bf16 %v202
      %v235 = vunpack.c.l.bf16 %v203
      %v236 = vunpack.c.l.bf16 %v204
      %v237 = vunpack.c.l.bf16 %v205
      %v238 = vld [vmem:[%s1] sm:$0x1]
      %v240 = vlaneseq
      %v241 = vshrl.u32 %v240, 7
      %v242 = vsub.s32 0, %v241
      %v243 = vrot.slane %v238, %v242
      %v245 = vmul.f32 %v206, %v243
      %v246 = vmul.f32 %v207, %v243
      %v247 = vmul.f32 %v208, %v243
      %v248 = vmul.f32 %v209, %v243
      %v249 = vmul.f32 %v210, %v243
      %v250 = vmul.f32 %v211, %v243
      %v251 = vmul.f32 %v212, %v243
      %v252 = vmul.f32 %v213, %v243
      %v253 = vmul.f32 %v214, %v243
      %v254 = vmul.f32 %v215, %v243
      %v255 = vmul.f32 %v216, %v243
      %v256 = vmul.f32 %v217, %v243
      %v257 = vmul.f32 %v218, %v243
      %v258 = vmul.f32 %v219, %v243
      %v259 = vmul.f32 %v220, %v243
      %v260 = vmul.f32 %v221, %v243
      %v261 = vmul.f32 %v222, %v243
      %v262 = vmul.f32 %v223, %v243
      %v263 = vmul.f32 %v224, %v243
      %v264 = vmul.f32 %v225, %v243
      %v265 = vmul.f32 %v226, %v243
      %v266 = vmul.f32 %v227, %v243
      %v267 = vmul.f32 %v228, %v243
      %v268 = vmul.f32 %v229, %v243
      %v269 = vmul.f32 %v230, %v243
      %v270 = vmul.f32 %v231, %v243
      %v271 = vmul.f32 %v232, %v243
      %v272 = vmul.f32 %v233, %v243
      %v273 = vmul.f32 %v234, %v243
      %v274 = vmul.f32 %v235, %v243
      %v275 = vmul.f32 %v236, %v243
      %v276 = vmul.f32 %v237, %v243
      %v277 = vld [vmem:[%s2] sm:$0x1]
      %v279 = vlaneseq
      %v280 = vshrl.u32 %v279, 7
      %v281 = vsub.s32 0, %v280
      %v282 = vrot.slane %v277, %v281
      %v284 = vadd.f32 %v245, %v282
      %v285 = vadd.f32 %v246, %v282
      %v286 = vadd.f32 %v247, %v282
      %v287 = vadd.f32 %v248, %v282
      %v288 = vadd.f32 %v249, %v282
      %v289 = vadd.f32 %v250, %v282
      %v290 = vadd.f32 %v251, %v282
      %v291 = vadd.f32 %v252, %v282
      %v292 = vadd.f32 %v253, %v282
      %v293 = vadd.f32 %v254, %v282
      %v294 = vadd.f32 %v255, %v282
      %v295 = vadd.f32 %v256, %v282
      %v296 = vadd.f32 %v257, %v282
      %v297 = vadd.f32 %v258, %v282
      %v298 = vadd.f32 %v259, %v282
      %v299 = vadd.f32 %v260, %v282
      %v300 = vadd.f32 %v261, %v282
      %v301 = vadd.f32 %v262, %v282
      %v302 = vadd.f32 %v263, %v282
      %v303 = vadd.f32 %v264, %v282
      %v304 = vadd.f32 %v265, %v282
      %v305 = vadd.f32 %v266, %v282
      %v306 = vadd.f32 %v267, %v282
      %v307 = vadd.f32 %v268, %v282
      %v308 = vadd.f32 %v269, %v282
      %v309 = vadd.f32 %v270, %v282
      %v310 = vadd.f32 %v271, %v282
      %v311 = vadd.f32 %v272, %v282
      %v312 = vadd.f32 %v273, %v282
      %v313 = vadd.f32 %v274, %v282
      %v314 = vadd.f32 %v275, %v282
      %v315 = vadd.f32 %v276, %v282
      %v316 = vmax.f32 %v284, 0.0
      %v317 = vmax.f32 %v285, 0.0
      %v318 = vmax.f32 %v286, 0.0
      %v319 = vmax.f32 %v287, 0.0
      %v320 = vmax.f32 %v288, 0.0
      %v321 = vmax.f32 %v289, 0.0
      %v322 = vmax.f32 %v290, 0.0
      %v323 = vmax.f32 %v291, 0.0
      %v324 = vmax.f32 %v292, 0.0
      %v325 = vmax.f32 %v293, 0.0
      %v326 = vmax.f32 %v294, 0.0
      %v327 = vmax.f32 %v295, 0.0
      %v328 = vmax.f32 %v296, 0.0
      %v329 = vmax.f32 %v297, 0.0
      %v330 = vmax.f32 %v298, 0.0
      %v331 = vmax.f32 %v299, 0.0
      %v332 = vmax.f32 %v300, 0.0
      %v333 = vmax.f32 %v301, 0.0
      %v334 = vmax.f32 %v302, 0.0
      %v335 = vmax.f32 %v303, 0.0
      %v336 = vmax.f32 %v304, 0.0
      %v337 = vmax.f32 %v305, 0.0
      %v338 = vmax.f32 %v306, 0.0
      %v339 = vmax.f32 %v307, 0.0
      %v340 = vmax.f32 %v308, 0.0
      %v341 = vmax.f32 %v309, 0.0
      %v342 = vmax.f32 %v310, 0.0
      %v343 = vmax.f32 %v311, 0.0
      %v344 = vmax.f32 %v312, 0.0
      %v345 = vmax.f32 %v313, 0.0
      %v346 = vmax.f32 %v314, 0.0
      %v347 = vmax.f32 %v315, 0.0
      %v348 = vpack.c.bf16 %v317, %v316
      %v349 = vpack.c.bf16 %v319, %v318
      %v350 = vpack.c.bf16 %v321, %v320
      %v351 = vpack.c.bf16 %v323, %v322
      %v352 = vpack.c.bf16 %v325, %v324
      %v353 = vpack.c.bf16 %v327, %v326
      %v354 = vpack.c.bf16 %v329, %v328
      %v355 = vpack.c.bf16 %v331, %v330
      %v356 = vpack.c.bf16 %v333, %v332
      %v357 = vpack.c.bf16 %v335, %v334
      %v358 = vpack.c.bf16 %v337, %v336
      %v359 = vpack.c.bf16 %v339, %v338
      %v360 = vpack.c.bf16 %v341, %v340
      %v361 = vpack.c.bf16 %v343, %v342
      %v362 = vpack.c.bf16 %v345, %v344
      %v363 = vpack.c.bf16 %v347, %v346
      %v380 = vunpack.c.l.b16 %v348
      %v381 = vunpack.c.h.b16 %v348
      %v382 = vunpack.c.l.b16 %v349
      %v383 = vunpack.c.h.b16 %v349
      %v384 = vunpack.c.l.b16 %v350
      %v385 = vunpack.c.h.b16 %v350
      %v386 = vunpack.c.l.b16 %v351
      %v387 = vunpack.c.h.b16 %v351
      %v388 = vunpack.c.l.b16 %v352
      %v389 = vunpack.c.h.b16 %v352
      %v390 = vunpack.c.l.b16 %v353
      %v391 = vunpack.c.h.b16 %v353
      %v392 = vunpack.c.l.b16 %v354
      %v393 = vunpack.c.h.b16 %v354
      %v394 = vunpack.c.l.b16 %v355
      %v395 = vunpack.c.h.b16 %v355
      %v396 = vunpack.c.l.b16 %v356
      %v397 = vunpack.c.h.b16 %v356
      %v398 = vunpack.c.l.b16 %v357
      %v399 = vunpack.c.h.b16 %v357
      %v400 = vunpack.c.l.b16 %v358
      %v401 = vunpack.c.h.b16 %v358
      %v402 = vunpack.c.l.b16 %v359
      %v403 = vunpack.c.h.b16 %v359
      %v404 = vunpack.c.l.b16 %v360
      %v405 = vunpack.c.h.b16 %v360
      %v406 = vunpack.c.l.b16 %v361
      %v407 = vunpack.c.h.b16 %v361
      %v408 = vunpack.c.l.b16 %v362
      %v409 = vunpack.c.h.b16 %v362
      %v410 = vunpack.c.l.b16 %v363
      %v411 = vunpack.c.h.b16 %v363
      %v412 = vpack.c.b16 %v380, %v380
      %v413 = vpack.c.b16 %v381, %v381
      %v414 = vpack.c.b16 %v382, %v382
      %v415 = vpack.c.b16 %v383, %v383
      %v416 = vpack.c.b16 %v384, %v384
      %v417 = vpack.c.b16 %v385, %v385
      %v418 = vpack.c.b16 %v386, %v386
      %v419 = vpack.c.b16 %v387, %v387
      %v420 = vpack.c.b16 %v388, %v388
      %v421 = vpack.c.b16 %v389, %v389
      %v422 = vpack.c.b16 %v390, %v390
      %v423 = vpack.c.b16 %v391, %v391
      %v424 = vpack.c.b16 %v392, %v392
      %v425 = vpack.c.b16 %v393, %v393
      %v426 = vpack.c.b16 %v394, %v394
      %v427 = vpack.c.b16 %v395, %v395
      %v428 = vpack.c.b16 %v396, %v396
      %v429 = vpack.c.b16 %v397, %v397
      %v430 = vpack.c.b16 %v398, %v398
      %v431 = vpack.c.b16 %v399, %v399
      %v432 = vpack.c.b16 %v400, %v400
      %v433 = vpack.c.b16 %v401, %v401
      %v434 = vpack.c.b16 %v402, %v402
      %v435 = vpack.c.b16 %v403, %v403
      %v436 = vpack.c.b16 %v404, %v404
      %v437 = vpack.c.b16 %v405, %v405
      %v438 = vpack.c.b16 %v406, %v406
      %v439 = vpack.c.b16 %v407, %v407
      %v440 = vpack.c.b16 %v408, %v408
      %v441 = vpack.c.b16 %v409, %v409
      %v442 = vpack.c.b16 %v410, %v410
      %v443 = vpack.c.b16 %v411, %v411
      %476 = vst [vmem:[%s172] sm:$0xf] %v412
      %477 = vst [vmem:[%s172 + $0x4] sm:$0xf] %v413
      %478 = vst [vmem:[%s172 + $0x8] sm:$0xf] %v414
      %479 = vst [vmem:[%s172 + $0xc] sm:$0xf] %v415
      %480 = vst [vmem:[%s172 + $0x10] sm:$0xf] %v416
      %481 = vst [vmem:[%s172 + $0x14] sm:$0xf] %v417
      %482 = vst [vmem:[%s172 + $0x18] sm:$0xf] %v418
      %483 = vst [vmem:[%s172 + $0x1c] sm:$0xf] %v419
      %484 = vst [vmem:[%s172 + $0x20] sm:$0xf] %v420
      %485 = vst [vmem:[%s172 + $0x24] sm:$0xf] %v421
      %486 = vst [vmem:[%s172 + $0x28] sm:$0xf] %v422
      %487 = vst [vmem:[%s172 + $0x2c] sm:$0xf] %v423
      %488 = vst [vmem:[%s172 + $0x30] sm:$0xf] %v424
      %489 = vst [vmem:[%s172 + $0x34] sm:$0xf] %v425
      %490 = vst [vmem:[%s172 + $0x38] sm:$0xf] %v426
      %491 = vst [vmem:[%s172 + $0x3c] sm:$0xf] %v427
      %492 = vst [vmem:[%s172 + $0x40] sm:$0xf] %v428
      %493 = vst [vmem:[%s172 + $0x44] sm:$0xf] %v429
      %494 = vst [vmem:[%s172 + $0x48] sm:$0xf] %v430
      %495 = vst [vmem:[%s172 + $0x4c] sm:$0xf] %v431
      %496 = vst [vmem:[%s172 + $0x50] sm:$0xf] %v432
      %497 = vst [vmem:[%s172 + $0x54] sm:$0xf] %v433
      %498 = vst [vmem:[%s172 + $0x58] sm:$0xf] %v434
      %499 = vst [vmem:[%s172 + $0x5c] sm:$0xf] %v435
      %500 = vst [vmem:[%s172 + $0x60] sm:$0xf] %v436
      %501 = vst [vmem:[%s172 + $0x64] sm:$0xf] %v437
      %502 = vst [vmem:[%s172 + $0x68] sm:$0xf] %v438
      %503 = vst [vmem:[%s172 + $0x6c] sm:$0xf] %v439
      %504 = vst [vmem:[%s172 + $0x70] sm:$0xf] %v440
      %505 = vst [vmem:[%s172 + $0x74] sm:$0xf] %v441
      %506 = vst [vmem:[%s172 + $0x78] sm:$0xf] %v442
      %507 = vst [vmem:[%s172 + $0x7c] sm:$0xf] %v443
      %s508 = smul.u32 32, %s14
      %p509 = scmp.lt.s32.totalorder %s508, 63
      %s510 = scalar_select %p509, %s508, 63
      %s511 = smul.addr %s510, 4
      %s512 = scalar_lea.vmem %s3, %s511
      // Predicated region
      $region33: #{basic_block_forward.5} parent=31 // pred_check
        %p513 = pneg %p100
      $region34: #{basic_block_forward.5} parent=31 // pred_check_branch
        %515 = sbr.rel (%p513) target = $region36
      $region35: #{basic_block_forward.5} parent=31 // pred_region
        %s516 = smul.u32 32, %s14
      $region36: #{basic_block_forward.5} parent=31 // pred_fallthru
        _
    $region32: #{basic_block_forward.5} parent=5 // pred_fallthru
      _
    %p517 = scmp.le.s32.totalorder 2, %s9
    // Predicated region
    $region37: #{basic_block_forward.5} parent=5 // pred_check
      %p518 = pneg %p517
    $region38: #{basic_block_forward.5} parent=5 // pred_check_branch
      %520 = sbr.rel (%p518) target = $region40
    $region39: #{basic_block_forward.5} parent=5 // pred_region
      %s521 = ssub.s32 %s9, 2
      // Predicated region
      $region41: #{basic_block_forward.5} parent=39 // pred_check
        %p522 = pneg %p106
      $region42: #{basic_block_forward.5} parent=39 // pred_check_branch
        %524 = sbr.rel (%p522) target = $region44
      $region43: #{basic_block_forward.5} parent=39 // pred_region
        %s525 = smul.u32 32, %s15
        %p526 = scmp.lt.s32.totalorder %s525, 63
        %s527 = scalar_select %p526, %s525, 63
        %s528 = smul.addr %s527, 4
        %s529 = scalar_lea.vmem %s3, %s528
      $region44: #{basic_block_forward.5} parent=39 // pred_fallthru
        _
    $region40: #{basic_block_forward.5} parent=5 // pred_fallthru
      _
  $region6: #{basic_block_forward.5} parent=0 // loop_footer
    %s13 = sadd.s32 1, %s9
  $region7: #{basic_block_forward.5} parent=0 // loop_footer_branch
    %8 = sbr.rel target = $region3
  $region8: #{basic_block_forward.5} parent=0 // loop_exit
    _

// kernel: basic_block_forward.4
$region0: #{basic_block_forward.4}
  #allocation0 [shape = 'u32[]', space=smem, size = 0x4, offset = 0x4, fixed_abs, tag = 'smem constant byte address 0x4 - core index']
  #allocation1 [shape = 'u32[144,128]{1,0:T(1,128)}', space=vmem, size = 0x12000, scoped, tag = 'internal scratch']
  %s0 = inlined_call_operand.vmem [shape: bf16[512,128], index: 0, kind: input, shape index: {}]
  %s1 = inlined_call_operand.vmem [shape: bf16[128,128], index: 1, kind: input, shape index: {}]
  %s2 = inlined_call_operand.vmem [shape: bf16[512,128], index: 2, kind: output, shape index: {0}]
  %s3 = inlined_call_operand.vmem [shape: f32[16,128], index: 3, kind: output, shape index: {1}]
  %4 = xla_tuple %s2, %s3
  %s5 = sld [smem:[#allocation0]]
  $region49: #{basic_block_forward.4} parent=0
    _
  %s7 = ssub.s32 1, %s5
  %s8 = scalar_select 0, %s7, %s5
  loop: start=0, step=1, limit=4
  $region2: #{basic_block_forward.4} parent=0 // loop_pre_header
    _
  $region3: #{basic_block_forward.4} parent=0 // loop_header
    %s10 = sphi 0, %s14
    %p11 = scmp.ge.s32.totalorder %s10, 4
    %s20 = sphi 0, %s22
    %s23 = sphi 0, %s20
    %s24 = sphi 0, %s23
    %s40 = sphi 0, %s24
    %s44 = sphi 0, %s44
    %s46 = sphi 0, %s44
    %s47 = sphi 0, %s46
    %s61 = sphi 0, %s47
    %s67 = sphi 0, %s69
    %s70 = sphi 0, %s67
    %s71 = sphi 0, %s70
    %s87 = sphi 0, %s71
    %s93 = sphi 0, %s95
    %s96 = sphi 0, %s93
    %s97 = sphi 0, %s96
    %s113 = sphi 0, %s97
  $region4: #{basic_block_forward.4} parent=0 // loop_header_branch
    %13 = sbr.rel (%p11) target = $region8
  $region5: #{basic_block_forward.4} parent=0 // loop_body
    %s15 = ssub.s32 %s10, 1
    %s16 = ssub.s32 %s10, 2
    %s17 = sadd.s32 %s10, 1
    %s18 = ssub.s32 %s10, %s17
    %p19 = scmp.eq.s32.totalorder %s18, 0
    %s21 = sadd.s32 %s20, 1
    %s22 = scalar_select %p19, %s20, %s21
    %p25 = pneg %p19
    %p26 = scmp.eq.s32.totalorder %s10, 1
    %p27 = por %p25, %p26
    %p28 = scmp.ne.s32.totalorder %s20, %s23
    %p29 = scmp.eq.s32.totalorder %s10, 0
    %p30 = por %p28, %p29
    %p31 = scmp.ne.s32.totalorder %s20, %s23
    %p32 = scmp.eq.s32.totalorder %s15, 1
    %p33 = por %p31, %p32
    %p34 = scmp.ne.s32.totalorder %s23, %s24
    %p35 = scmp.eq.s32.totalorder %s15, 0
    %p36 = por %p34, %p35
    %p37 = scmp.ne.s32.totalorder %s23, %s24
    %p38 = scmp.eq.s32.totalorder %s16, 1
    %p39 = por %p37, %p38
    %p41 = scmp.ne.s32.totalorder %s24, %s40
    %p42 = scmp.eq.s32.totalorder %s16, 0
    %p43 = por %p41, %p42
    %s45 = sadd.s32 %s44, 1
    %p48 = scmp.eq.s32.totalorder %s10, 1
    %p49 = scmp.ne.s32.totalorder %s44, %s46
    %p50 = scmp.eq.s32.totalorder %s10, 0
    %p51 = por %p49, %p50
    %p52 = scmp.ne.s32.totalorder %s44, %s46
    %p53 = scmp.eq.s32.totalorder %s15, 1
    %p54 = por %p52, %p53
    %p55 = scmp.ne.s32.totalorder %s46, %s47
    %p56 = scmp.eq.s32.totalorder %s15, 0
    %p57 = por %p55, %p56
    %p58 = scmp.ne.s32.totalorder %s46, %s47
    %p59 = scmp.eq.s32.totalorder %s16, 1
    %p60 = por %p58, %p59
    %p62 = scmp.ne.s32.totalorder %s47, %s61
    %p63 = scmp.eq.s32.totalorder %s16, 0
    %p64 = por %p62, %p63
    %s65 = ssub.s32 %s10, %s17
    %p66 = scmp.eq.s32.totalorder %s65, 0
    %s68 = sadd.s32 %s67, 1
    %s69 = scalar_select %p66, %s67, %s68
    %p72 = pneg %p66
    %p73 = scmp.eq.s32.totalorder %s10, 1
    %p74 = por %p72, %p73
    %p75 = scmp.ne.s32.totalorder %s67, %s70
    %p76 = scmp.eq.s32.totalorder %s10, 0
    %p77 = por %p75, %p76
    %p78 = scmp.ne.s32.totalorder %s67, %s70
    %p79 = scmp.eq.s32.totalorder %s15, 1
    %p80 = por %p78, %p79
    %p81 = scmp.ne.s32.totalorder %s70, %s71
    %p82 = scmp.eq.s32.totalorder %s15, 0
    %p83 = por %p81, %p82
    %p84 = scmp.ne.s32.totalorder %s70, %s71
    %p85 = scmp.eq.s32.totalorder %s16, 1
    %p86 = por %p84, %p85
    %p88 = scmp.ne.s32.totalorder %s71, %s87
    %p89 = scmp.eq.s32.totalorder %s16, 0
    %p90 = por %p88, %p89
    %s91 = ssub.s32 %s10, %s17
    %p92 = scmp.eq.s32.totalorder %s91, 0
    %s94 = sadd.s32 %s93, 1
    %s95 = scalar_select %p92, %s93, %s94
    %p98 = pneg %p92
    %p99 = scmp.eq.s32.totalorder %s10, 1
    %p100 = por %p98, %p99
    %p101 = scmp.ne.s32.totalorder %s93, %s96
    %p102 = scmp.eq.s32.totalorder %s10, 0
    %p103 = por %p101, %p102
    %p104 = scmp.ne.s32.totalorder %s93, %s96
    %p105 = scmp.eq.s32.totalorder %s15, 1
    %p106 = por %p104, %p105
    %p107 = scmp.ne.s32.totalorder %s96, %s97
    %p108 = scmp.eq.s32.totalorder %s15, 0
    %p109 = por %p107, %p108
    %p110 = scmp.ne.s32.totalorder %s96, %s97
    %p111 = scmp.eq.s32.totalorder %s16, 1
    %p112 = por %p110, %p111
    %p114 = scmp.ne.s32.totalorder %s97, %s113
    %p115 = scmp.eq.s32.totalorder %s16, 0
    %p116 = por %p114, %p115
    %p117 = scmp.le.s32.totalorder 1, %s10
    %p118 = scmp.lt.s32.totalorder %s10, 3
    %p119 = pnand %p117, %p118
    %p120 = pneg %p119
    // Predicated region
    $region9: #{basic_block_forward.4} parent=5 // pred_check
      _
    $region10: #{basic_block_forward.4} parent=5 // pred_check_branch
      %122 = sbr.rel (%p119) target = $region12
    $region11: #{basic_block_forward.4} parent=5 // pred_region
      %s123 = ssub.s32 %s10, 1
      // Predicated region
      $region13: #{basic_block_forward.4} parent=11 // pred_check
        %p124 = pneg %p57
      $region14: #{basic_block_forward.4} parent=11 // pred_check_branch
        %126 = sbr.rel (%p124) target = $region16
      $region15: #{basic_block_forward.4} parent=11 // pred_region
        _
      $region16: #{basic_block_forward.4} parent=11 // pred_fallthru
        _
    $region12: #{basic_block_forward.4} parent=5 // pred_fallthru
      _
    %p127 = scmp.lt.s32.totalorder %s10, 2
    // Predicated region
    $region17: #{basic_block_forward.4} parent=5 // pred_check
      %p128 = pneg %p127
    $region18: #{basic_block_forward.4} parent=5 // pred_check_branch
      %130 = sbr.rel (%p128) target = $region20
    $region19: #{basic_block_forward.4} parent=5 // pred_region
      // Predicated region
      $region21: #{basic_block_forward.4} parent=19 // pred_check
        %p131 = pneg %p30
      $region22: #{basic_block_forward.4} parent=19 // pred_check_branch
        %133 = sbr.rel (%p131) target = $region24
      $region23: #{basic_block_forward.4} parent=19 // pred_region
        %s134 = smul.u32 32, %s10
        %p135 = scmp.lt.s32.totalorder %s134, 63
        %s136 = scalar_select %p135, %s134, 63
        %s137 = smul.addr %s136, 4
        %s138 = scalar_lea.vmem %s0, %s137
        %s139 = smul.u32 32, %s10
      $region24: #{basic_block_forward.4} parent=19 // pred_fallthru
        _
    $region20: #{basic_block_forward.4} parent=5 // pred_fallthru
      _
    %p140 = scmp.le.s32.totalorder 1, %s10
    %p141 = scmp.lt.s32.totalorder %s10, 3
    %p142 = pnand %p140, %p141
    %p143 = pneg %p142
    // Predicated region
    $region25: #{basic_block_forward.4} parent=5 // pred_check
      _
    $region26: #{basic_block_forward.4} parent=5 // pred_check_branch
      %145 = sbr.rel (%p142) target = $region28
    $region27: #{basic_block_forward.4} parent=5 // pred_region
      %s146 = ssub.s32 %s10, 1
      %s147 = smul.u32 32, %s15
      %p148 = scmp.lt.s32.totalorder %s147, 63
      %s149 = scalar_select %p148, %s147, 63
      %s150 = smul.addr %s149, 4
      %s151 = scalar_lea.vmem %s0, %s150
      %p152 = pneg %p36
      %p153 = pneg %p33
      %p154 = pneg %p57
      %p155 = pneg %p54
      %p156 = pneg %p83
      %p157 = pneg %p80
      %s158 = smul.u32 32, %s15
      %p159 = scmp.lt.s32.totalorder %s158, 63
      %s160 = scalar_select %p159, %s158, 63
      %s161 = smul.addr %s160, 4
      %s162 = scalar_lea.vmem %s2, %s161
      %p163 = pneg %p109
      %p164 = pneg %p106
      %p165 = scmp.lt.s32.totalorder %s15, 1
      %s166 = scalar_select %p165, %s15, 1
      %s167 = smul.addr %s166, 8
      %s168 = scalar_lea.vmem %s3, %s167
      %s169 = smul.u32 32, %s15
      %p170 = scmp.lt.s32.totalorder %s169, 63
      %s171 = scalar_select %p170, %s169, 63
      %s172 = smul.addr %s171, 4
      %s173 = scalar_lea.vmem %s0, %s172
      %s174 = smul.u32 32, %s15
      %s175 = smul.u32 32, %s15
      %p176 = scmp.lt.s32.totalorder %s175, 63
      %s177 = scalar_select %p176, %s175, 63
      %s178 = smul.addr %s177, 4
      %s179 = scalar_lea.vmem %s2, %s178
      %s180 = smul.u32 32, %s15
      %p181 = scmp.lt.s32.totalorder %s15, 1
      %s182 = scalar_select %p181, %s15, 1
      %s183 = smul.addr %s182, 8
      %s184 = scalar_lea.vmem %s3, %s183
      %v186 = vld [vmem:[%s173] sm:$0xf]
      %v187 = vld [vmem:[%s173 + $0x4] sm:$0xf]
      %v188 = vld [vmem:[%s173 + $0x8] sm:$0xf]
      %v189 = vld [vmem:[%s173 + $0xc] sm:$0xf]
      %v190 = vld [vmem:[%s173 + $0x10] sm:$0xf]
      %v191 = vld [vmem:[%s173 + $0x14] sm:$0xf]
      %v192 = vld [vmem:[%s173 + $0x18] sm:$0xf]
      %v193 = vld [vmem:[%s173 + $0x1c] sm:$0xf]
      %v194 = vld [vmem:[%s173 + $0x20] sm:$0xf]
      %v195 = vld [vmem:[%s173 + $0x24] sm:$0xf]
      %v196 = vld [vmem:[%s173 + $0x28] sm:$0xf]
      %v197 = vld [vmem:[%s173 + $0x2c] sm:$0xf]
      %v198 = vld [vmem:[%s173 + $0x30] sm:$0xf]
      %v199 = vld [vmem:[%s173 + $0x34] sm:$0xf]
      %v200 = vld [vmem:[%s173 + $0x38] sm:$0xf]
      %v201 = vld [vmem:[%s173 + $0x3c] sm:$0xf]
      %v202 = vld [vmem:[%s173 + $0x40] sm:$0xf]
      %v203 = vld [vmem:[%s173 + $0x44] sm:$0xf]
      %v204 = vld [vmem:[%s173 + $0x48] sm:$0xf]
      %v205 = vld [vmem:[%s173 + $0x4c] sm:$0xf]
      %v206 = vld [vmem:[%s173 + $0x50] sm:$0xf]
      %v207 = vld [vmem:[%s173 + $0x54] sm:$0xf]
      %v208 = vld [vmem:[%s173 + $0x58] sm:$0xf]
      %v209 = vld [vmem:[%s173 + $0x5c] sm:$0xf]
      %v210 = vld [vmem:[%s173 + $0x60] sm:$0xf]
      %v211 = vld [vmem:[%s173 + $0x64] sm:$0xf]
      %v212 = vld [vmem:[%s173 + $0x68] sm:$0xf]
      %v213 = vld [vmem:[%s173 + $0x6c] sm:$0xf]
      %v214 = vld [vmem:[%s173 + $0x70] sm:$0xf]
      %v215 = vld [vmem:[%s173 + $0x74] sm:$0xf]
      %v216 = vld [vmem:[%s173 + $0x78] sm:$0xf]
      %v217 = vld [vmem:[%s173 + $0x7c] sm:$0xf]
      %v218 = vld [vmem:[%s1] sm:$0xf]
      %v219 = vld [vmem:[%s1 + $0x4] sm:$0xf]
      %v220 = vld [vmem:[%s1 + $0x8] sm:$0xf]
      %v221 = vld [vmem:[%s1 + $0xc] sm:$0xf]
      %v222 = vld [vmem:[%s1 + $0x10] sm:$0xf]
      %v223 = vld [vmem:[%s1 + $0x14] sm:$0xf]
      %v224 = vld [vmem:[%s1 + $0x18] sm:$0xf]
      %v225 = vld [vmem:[%s1 + $0x1c] sm:$0xf]
      %v226 = vld [vmem:[%s1 + $0x20] sm:$0xf]
      %v227 = vld [vmem:[%s1 + $0x24] sm:$0xf]
      %v228 = vld [vmem:[%s1 + $0x28] sm:$0xf]
      %v229 = vld [vmem:[%s1 + $0x2c] sm:$0xf]
      %v230 = vld [vmem:[%s1 + $0x30] sm:$0xf]
      %v231 = vld [vmem:[%s1 + $0x34] sm:$0xf]
      %v232 = vld [vmem:[%s1 + $0x38] sm:$0xf]
      %v233 = vld [vmem:[%s1 + $0x3c] sm:$0xf]
      %v266 = vunpack.c.l.b16 %v186
      %v267 = vunpack.c.l.b16 %v187
      %v268 = vunpack.c.l.b16 %v188
      %v269 = vunpack.c.l.b16 %v189
      %v270 = vunpack.c.l.b16 %v190
      %v271 = vunpack.c.l.b16 %v191
      %v272 = vunpack.c.l.b16 %v192
      %v273 = vunpack.c.l.b16 %v193
      %v274 = vunpack.c.l.b16 %v194
      %v275 = vunpack.c.l.b16 %v195
      %v276 = vunpack.c.l.b16 %v196
      %v277 = vunpack.c.l.b16 %v197
      %v278 = vunpack.c.l.b16 %v198
      %v279 = vunpack.c.l.b16 %v199
      %v280 = vunpack.c.l.b16 %v200
      %v281 = vunpack.c.l.b16 %v201
      %v282 = vunpack.c.l.b16 %v202
      %v283 = vunpack.c.l.b16 %v203
      %v284 = vunpack.c.l.b16 %v204
      %v285 = vunpack.c.l.b16 %v205
      %v286 = vunpack.c.l.b16 %v206
      %v287 = vunpack.c.l.b16 %v207
      %v288 = vunpack.c.l.b16 %v208
      %v289 = vunpack.c.l.b16 %v209
      %v290 = vunpack.c.l.b16 %v210
      %v291 = vunpack.c.l.b16 %v211
      %v292 = vunpack.c.l.b16 %v212
      %v293 = vunpack.c.l.b16 %v213
      %v294 = vunpack.c.l.b16 %v214
      %v295 = vunpack.c.l.b16 %v215
      %v296 = vunpack.c.l.b16 %v216
      %v297 = vunpack.c.l.b16 %v217
      %v298 = vpack.c.b16 %v267, %v266
      %v299 = vpack.c.b16 %v269, %v268
      %v300 = vpack.c.b16 %v271, %v270
      %v301 = vpack.c.b16 %v273, %v272
      %v302 = vpack.c.b16 %v275, %v274
      %v303 = vpack.c.b16 %v277, %v276
      %v304 = vpack.c.b16 %v279, %v278
      %v305 = vpack.c.b16 %v281, %v280
      %v306 = vpack.c.b16 %v283, %v282
      %v307 = vpack.c.b16 %v285, %v284
      %v308 = vpack.c.b16 %v287, %v286
      %v309 = vpack.c.b16 %v289, %v288
      %v310 = vpack.c.b16 %v291, %v290
      %v311 = vpack.c.b16 %v293, %v292
      %v312 = vpack.c.b16 %v295, %v294
      %v313 = vpack.c.b16 %v297, %v296
      %v346 = vunpack.c.l.b16 %v218
      %v347 = vunpack.c.l.b16 %v219
      %v348 = vunpack.c.l.b16 %v220
      %v349 = vunpack.c.l.b16 %v221
      %v350 = vunpack.c.l.b16 %v222
      %v351 = vunpack.c.l.b16 %v223
      %v352 = vunpack.c.l.b16 %v224
      %v353 = vunpack.c.l.b16 %v225
      %v354 = vunpack.c.l.b16 %v226
      %v355 = vunpack.c.l.b16 %v227
      %v356 = vunpack.c.l.b16 %v228
      %v357 = vunpack.c.l.b16 %v229
      %v358 = vunpack.c.l.b16 %v230
      %v359 = vunpack.c.l.b16 %v231
      %v360 = vunpack.c.l.b16 %v232
      %v361 = vunpack.c.l.b16 %v233
      %v362 = vpack.c.b16 %v347, %v346
      %v363 = vpack.c.b16 %v349, %v348
      %v364 = vpack.c.b16 %v351, %v350
      %v365 = vpack.c.b16 %v353, %v352
      %v366 = vpack.c.b16 %v355, %v354
      %v367 = vpack.c.b16 %v357, %v356
      %v368 = vpack.c.b16 %v359, %v358
      %v369 = vpack.c.b16 %v361, %v360
      %378 = vmatprep.subr.bf16.mxu0 0
      %379 = vmatpush1.bf16.msra.mxu0 %v369
      %380 = vmatprep.subr.bf16.mxu0 0
      %381 = vmatpush1.bf16.msra.mxu0 %v368
      %382 = vmatprep.subr.bf16.mxu0 0
      %383 = vmatpush1.bf16.msra.mxu0 %v367
      %384 = vmatprep.subr.bf16.mxu0 0
      %385 = vmatpush1.bf16.msra.mxu0 %v366
      %386 = vmatprep.subr.bf16.mxu0 0
      %387 = vmatpush1.bf16.msra.mxu0 %v365
      %388 = vmatprep.subr.bf16.mxu0 0
      %389 = vmatpush1.bf16.msra.mxu0 %v364
      %390 = vmatprep.subr.bf16.mxu0 0
      %391 = vmatpush1.bf16.msra.mxu0 %v363
      %392 = vmatprep.subr.bf16.mxu0 0
      %393 = vmatpush1.bf16.msra.mxu0 %v362
      %394 = vmatprep.subr.bf16.mxu0 0
      %395 = vmatpush2.bf16.msra.mxu0 0
      %396 = vmatprep.subr.bf16.mxu0 0
      %397 = vmatpush2.bf16.msra.mxu0 0
      %398 = vmatprep.subr.bf16.mxu0 0
      %399 = vmatpush2.bf16.msra.mxu0 0
      %400 = vmatprep.subr.bf16.mxu0 0
      %401 = vmatpush2.bf16.msra.mxu0 0
      %402 = vmatprep.subr.bf16.mxu0 0
      %403 = vmatpush2.bf16.msra.mxu0 0
      %404 = vmatprep.subr.bf16.mxu0 0
      %405 = vmatpush2.bf16.msra.mxu0 0
      %406 = vmatprep.subr.bf16.mxu0 0
      %407 = vmatpush2.bf16.msra.mxu0 0
      %408 = vmatprep.subr.bf16.mxu0 0
      %409 = vmatpush2.bf16.msra.mxu0 0
      %410 = vmatprep.mubr.bf16.mxu0 0
      %411 = vmatmul.mubr.bf16.gmra.mxu0 %v298
      %v412 = vpop.f32.mrf.mxu0
      %v413 = vadd.f32 0.0, %v412
      %v414 = vpop.f32.mrf.mxu0
      %v415 = vpop.f32.mrf.mxu0
      %v416 = vadd.f32 0.0, %v415
      %v417 = vpop.f32.mrf.mxu0
      %418 = vmatprep.mubr.bf16.mxu0 0
      %419 = vmatmul.mubr.bf16.gmra.mxu0 %v299
      %v420 = vpop.f32.mrf.mxu0
      %v421 = vadd.f32 0.0, %v420
      %v422 = vpop.f32.mrf.mxu0
      %v423 = vpop.f32.mrf.mxu0
      %v424 = vadd.f32 0.0, %v423
      %v425 = vpop.f32.mrf.mxu0
      %426 = vmatprep.mubr.bf16.mxu0 0
      %427 = vmatmul.mubr.bf16.gmra.mxu0 %v300
      %v428 = vpop.f32.mrf.mxu0
      %v429 = vadd.f32 0.0, %v428
      %v430 = vpop.f32.mrf.mxu0
      %v431 = vpop.f32.mrf.mxu0
      %v432 = vadd.f32 0.0, %v431
      %v433 = vpop.f32.mrf.mxu0
      %434 = vmatprep.mubr.bf16.mxu0 0
      %435 = vmatmul.mubr.bf16.gmra.mxu0 %v301
      %v436 = vpop.f32.mrf.mxu0
      %v437 = vadd.f32 0.0, %v436
      %v438 = vpop.f32.mrf.mxu0
      %v439 = vpop.f32.mrf.mxu0
      %v440 = vadd.f32 0.0, %v439
      %v441 = vpop.f32.mrf.mxu0
      %442 = vmatprep.mubr.bf16.mxu0 0
      %443 = vmatmul.mubr.bf16.gmra.mxu0 %v302
      %v444 = vpop.f32.mrf.mxu0
      %v445 = vadd.f32 0.0, %v444
      %v446 = vpop.f32.mrf.mxu0
      %v447 = vpop.f32.mrf.mxu0
      %v448 = vadd.f32 0.0, %v447
      %v449 = vpop.f32.mrf.mxu0
      %450 = vmatprep.mubr.bf16.mxu0 0
      %451 = vmatmul.mubr.bf16.gmra.mxu0 %v303
      %v452 = vpop.f32.mrf.mxu0
      %v453 = vadd.f32 0.0, %v452
      %v454 = vpop.f32.mrf.mxu0
      %v455 = vpop.f32.mrf.mxu0
      %v456 = vadd.f32 0.0, %v455
      %v457 = vpop.f32.mrf.mxu0
      %458 = vmatprep.mubr.bf16.mxu0 0
      %459 = vmatmul.mubr.bf16.gmra.mxu0 %v304
      %v460 = vpop.f32.mrf.mxu0
      %v461 = vadd.f32 0.0, %v460
      %v462 = vpop.f32.mrf.mxu0
      %v463 = vpop.f32.mrf.mxu0
      %v464 = vadd.f32 0.0, %v463
      %v465 = vpop.f32.mrf.mxu0
      %466 = vmatprep.mubr.bf16.mxu0 0
      %467 = vmatmul.mubr.bf16.gmra.mxu0 %v305
      %v468 = vpop.f32.mrf.mxu0
      %v469 = vadd.f32 0.0, %v468
      %v470 = vpop.f32.mrf.mxu0
      %v471 = vpop.f32.mrf.mxu0
      %v472 = vadd.f32 0.0, %v471
      %v473 = vpop.f32.mrf.mxu0
      %474 = vmatprep.mubr.bf16.mxu0 0
      %475 = vmatmul.mubr.bf16.gmra.mxu0 %v306
      %v476 = vpop.f32.mrf.mxu0
      %v477 = vadd.f32 0.0, %v476
      %v478 = vpop.f32.mrf.mxu0
      %v479 = vpop.f32.mrf.mxu0
      %v480 = vadd.f32 0.0, %v479
      %v481 = vpop.f32.mrf.mxu0
      %482 = vmatprep.mubr.bf16.mxu0 0
      %483 = vmatmul.mubr.bf16.gmra.mxu0 %v307
      %v484 = vpop.f32.mrf.mxu0
      %v485 = vadd.f32 0.0, %v484
      %v486 = vpop.f32.mrf.mxu0
      %v487 = vpop.f32.mrf.mxu0
      %v488 = vadd.f32 0.0, %v487
      %v489 = vpop.f32.mrf.mxu0
      %490 = vmatprep.mubr.bf16.mxu0 0
      %491 = vmatmul.mubr.bf16.gmra.mxu0 %v308
      %v492 = vpop.f32.mrf.mxu0
      %v493 = vadd.f32 0.0, %v492
      %v494 = vpop.f32.mrf.mxu0
      %v495 = vpop.f32.mrf.mxu0
      %v496 = vadd.f32 0.0, %v495
      %v497 = vpop.f32.mrf.mxu0
      %498 = vmatprep.mubr.bf16.mxu0 0
      %499 = vmatmul.mubr.bf16.gmra.mxu0 %v309
      %v500 = vpop.f32.mrf.mxu0
      %v501 = vadd.f32 0.0, %v500
      %v502 = vpop.f32.mrf.mxu0
      %v503 = vpop.f32.mrf.mxu0
      %v504 = vadd.f32 0.0, %v503
      %v505 = vpop.f32.mrf.mxu0
      %506 = vmatprep.mubr.bf16.mxu0 0
      %507 = vmatmul.mubr.bf16.gmra.mxu0 %v310
      %v508 = vpop.f32.mrf.mxu0
      %v509 = vadd.f32 0.0, %v508
      %v510 = vpop.f32.mrf.mxu0
      %v511 = vpop.f32.mrf.mxu0
      %v512 = vadd.f32 0.0, %v511
      %v513 = vpop.f32.mrf.mxu0
      %514 = vmatprep.mubr.bf16.mxu0 0
      %515 = vmatmul.mubr.bf16.gmra.mxu0 %v311
      %v516 = vpop.f32.mrf.mxu0
      %v517 = vadd.f32 0.0, %v516
      %v518 = vpop.f32.mrf.mxu0
      %v519 = vpop.f32.mrf.mxu0
      %v520 = vadd.f32 0.0, %v519
      %v521 = vpop.f32.mrf.mxu0
      %522 = vmatprep.mubr.bf16.mxu0 0
      %523 = vmatmul.mubr.bf16.gmra.mxu0 %v312
      %v524 = vpop.f32.mrf.mxu0
      %v525 = vadd.f32 0.0, %v524
      %v526 = vpop.f32.mrf.mxu0
      %v527 = vpop.f32.mrf.mxu0
      %v528 = vadd.f32 0.0, %v527
      %v529 = vpop.f32.mrf.mxu0
      %530 = vmatprep.mubr.bf16.mxu0 0
      %531 = vmatmul.mubr.bf16.gmra.mxu0 %v313
      %v532 = vpop.f32.mrf.mxu0
      %v533 = vadd.f32 0.0, %v532
      %v534 = vpop.f32.mrf.mxu0
      %v535 = vpop.f32.mrf.mxu0
      %v536 = vadd.f32 0.0, %v535
      %v537 = vpop.f32.mrf.mxu0
      %538 = vdwg.mxu0
      %v539 = vpack.c.bf16 %v416, %v413
      %v540 = vpack.c.bf16 %v424, %v421
      %v541 = vpack.c.bf16 %v432, %v429
      %v542 = vpack.c.bf16 %v440, %v437
      %v543 = vpack.c.bf16 %v448, %v445
      %v544 = vpack.c.bf16 %v456, %v453
      %v545 = vpack.c.bf16 %v464, %v461
      %v546 = vpack.c.bf16 %v472, %v469
      %v547 = vpack.c.bf16 %v480, %v477
      %v548 = vpack.c.bf16 %v488, %v485
      %v549 = vpack.c.bf16 %v496, %v493
      %v550 = vpack.c.bf16 %v504, %v501
      %v551 = vpack.c.bf16 %v512, %v509
      %v552 = vpack.c.bf16 %v520, %v517
      %v553 = vpack.c.bf16 %v528, %v525
      %v554 = vpack.c.bf16 %v536, %v533
      %v571 = vunpack.c.l.b16 %v539
      %v572 = vunpack.c.h.b16 %v539
      %v573 = vunpack.c.l.b16 %v540
      %v574 = vunpack.c.h.b16 %v540
      %v575 = vunpack.c.l.b16 %v541
      %v576 = vunpack.c.h.b16 %v541
      %v577 = vunpack.c.l.b16 %v542
      %v578 = vunpack.c.h.b16 %v542
      %v579 = vunpack.c.l.b16 %v543
      %v580 = vunpack.c.h.b16 %v543
      %v581 = vunpack.c.l.b16 %v544
      %v582 = vunpack.c.h.b16 %v544
      %v583 = vunpack.c.l.b16 %v545
      %v584 = vunpack.c.h.b16 %v545
      %v585 = vunpack.c.l.b16 %v546
      %v586 = vunpack.c.h.b16 %v546
      %v587 = vunpack.c.l.b16 %v547
      %v588 = vunpack.c.h.b16 %v547
      %v589 = vunpack.c.l.b16 %v548
      %v590 = vunpack.c.h.b16 %v548
      %v591 = vunpack.c.l.b16 %v549
      %v592 = vunpack.c.h.b16 %v549
      %v593 = vunpack.c.l.b16 %v550
      %v594 = vunpack.c.h.b16 %v550
      %v595 = vunpack.c.l.b16 %v551
      %v596 = vunpack.c.h.b16 %v551
      %v597 = vunpack.c.l.b16 %v552
      %v598 = vunpack.c.h.b16 %v552
      %v599 = vunpack.c.l.b16 %v553
      %v600 = vunpack.c.h.b16 %v553
      %v601 = vunpack.c.l.b16 %v554
      %v602 = vunpack.c.h.b16 %v554
      %v603 = vpack.c.b16 %v571, %v571
      %v604 = vpack.c.b16 %v572, %v572
      %v605 = vpack.c.b16 %v573, %v573
      %v606 = vpack.c.b16 %v574, %v574
      %v607 = vpack.c.b16 %v575, %v575
      %v608 = vpack.c.b16 %v576, %v576
      %v609 = vpack.c.b16 %v577, %v577
      %v610 = vpack.c.b16 %v578, %v578
      %v611 = vpack.c.b16 %v579, %v579
      %v612 = vpack.c.b16 %v580, %v580
      %v613 = vpack.c.b16 %v581, %v581
      %v614 = vpack.c.b16 %v582, %v582
      %v615 = vpack.c.b16 %v583, %v583
      %v616 = vpack.c.b16 %v584, %v584
      %v617 = vpack.c.b16 %v585, %v585
      %v618 = vpack.c.b16 %v586, %v586
      %v619 = vpack.c.b16 %v587, %v587
      %v620 = vpack.c.b16 %v588, %v588
      %v621 = vpack.c.b16 %v589, %v589
      %v622 = vpack.c.b16 %v590, %v590
      %v623 = vpack.c.b16 %v591, %v591
      %v624 = vpack.c.b16 %v592, %v592
      %v625 = vpack.c.b16 %v593, %v593
      %v626 = vpack.c.b16 %v594, %v594
      %v627 = vpack.c.b16 %v595, %v595
      %v628 = vpack.c.b16 %v596, %v596
      %v629 = vpack.c.b16 %v597, %v597
      %v630 = vpack.c.b16 %v598, %v598
      %v631 = vpack.c.b16 %v599, %v599
      %v632 = vpack.c.b16 %v600, %v600
      %v633 = vpack.c.b16 %v601, %v601
      %v634 = vpack.c.b16 %v602, %v602
      %667 = vst [vmem:[%s179] sm:$0xf] %v603
      %668 = vst [vmem:[%s179 + $0x4] sm:$0xf] %v604
      %669 = vst [vmem:[%s179 + $0x8] sm:$0xf] %v605
      %670 = vst [vmem:[%s179 + $0xc] sm:$0xf] %v606
      %671 = vst [vmem:[%s179 + $0x10] sm:$0xf] %v607
      %672 = vst [vmem:[%s179 + $0x14] sm:$0xf] %v608
      %673 = vst [vmem:[%s179 + $0x18] sm:$0xf] %v609
      %674 = vst [vmem:[%s179 + $0x1c] sm:$0xf] %v610
      %675 = vst [vmem:[%s179 + $0x20] sm:$0xf] %v611
      %676 = vst [vmem:[%s179 + $0x24] sm:$0xf] %v612
      %677 = vst [vmem:[%s179 + $0x28] sm:$0xf] %v613
      %678 = vst [vmem:[%s179 + $0x2c] sm:$0xf] %v614
      %679 = vst [vmem:[%s179 + $0x30] sm:$0xf] %v615
      %680 = vst [vmem:[%s179 + $0x34] sm:$0xf] %v616
      %681 = vst [vmem:[%s179 + $0x38] sm:$0xf] %v617
      %682 = vst [vmem:[%s179 + $0x3c] sm:$0xf] %v618
      %683 = vst [vmem:[%s179 + $0x40] sm:$0xf] %v619
      %684 = vst [vmem:[%s179 + $0x44] sm:$0xf] %v620
      %685 = vst [vmem:[%s179 + $0x48] sm:$0xf] %v621
      %686 = vst [vmem:[%s179 + $0x4c] sm:$0xf] %v622
      %687 = vst [vmem:[%s179 + $0x50] sm:$0xf] %v623
      %688 = vst [vmem:[%s179 + $0x54] sm:$0xf] %v624
      %689 = vst [vmem:[%s179 + $0x58] sm:$0xf] %v625
      %690 = vst [vmem:[%s179 + $0x5c] sm:$0xf] %v626
      %691 = vst [vmem:[%s179 + $0x60] sm:$0xf] %v627
      %692 = vst [vmem:[%s179 + $0x64] sm:$0xf] %v628
      %693 = vst [vmem:[%s179 + $0x68] sm:$0xf] %v629
      %694 = vst [vmem:[%s179 + $0x6c] sm:$0xf] %v630
      %695 = vst [vmem:[%s179 + $0x70] sm:$0xf] %v631
      %696 = vst [vmem:[%s179 + $0x74] sm:$0xf] %v632
      %697 = vst [vmem:[%s179 + $0x78] sm:$0xf] %v633
      %698 = vst [vmem:[%s179 + $0x7c] sm:$0xf] %v634
      %699 = vst [vmem:[%s184] sm:$0xff] 0.0
      %v700 = vadd.f32 %v413, %v416
      %v701 = vadd.f32 %v700, %v421
      %v702 = vadd.f32 %v701, %v424
      %v703 = vadd.f32 %v702, %v429
      %v704 = vadd.f32 %v703, %v432
      %v705 = vadd.f32 %v704, %v437
      %v706 = vadd.f32 %v705, %v440
      %v707 = vadd.f32 %v706, %v445
      %v708 = vadd.f32 %v707, %v448
      %v709 = vadd.f32 %v708, %v453
      %v710 = vadd.f32 %v709, %v456
      %v711 = vadd.f32 %v710, %v461
      %v712 = vadd.f32 %v711, %v464
      %v713 = vadd.f32 %v712, %v469
      %v714 = vadd.f32 %v713, %v472
      %v715 = vadd.f32 %v714, %v477
      %v716 = vadd.f32 %v715, %v480
      %v717 = vadd.f32 %v716, %v485
      %v718 = vadd.f32 %v717, %v488
      %v719 = vadd.f32 %v718, %v493
      %v720 = vadd.f32 %v719, %v496
      %v721 = vadd.f32 %v720, %v501
      %v722 = vadd.f32 %v721, %v504
      %v723 = vadd.f32 %v722, %v509
      %v724 = vadd.f32 %v723, %v512
      %v725 = vadd.f32 %v724, %v517
      %v726 = vadd.f32 %v725, %v520
      %v727 = vadd.f32 %v726, %v525
      %v728 = vadd.f32 %v727, %v528
      %v729 = vadd.f32 %v728, %v533
      %v730 = vadd.f32 %v729, %v536
      %v731 = vrot.slane %v730, 4
      %v732 = vadd.f32 %v730, %v731
      %v733 = vrot.slane %v732, 2
      %v734 = vadd.f32 %v732, %v733
      %v735 = vrot.slane %v734, 1
      %v736 = vadd.f32 %v734, %v735
      %737 = vst [vmem:[%s184] sm:$0x1] %v736
      %v738 = vmul.f32 %v413, %v413
      %v739 = vmul.f32 %v416, %v416
      %v740 = vmul.f32 %v421, %v421
      %v741 = vmul.f32 %v424, %v424
      %v742 = vmul.f32 %v429, %v429
      %v743 = vmul.f32 %v432, %v432
      %v744 = vmul.f32 %v437, %v437
      %v745 = vmul.f32 %v440, %v440
      %v746 = vmul.f32 %v445, %v445
      %v747 = vmul.f32 %v448, %v448
      %v748 = vmul.f32 %v453, %v453
      %v749 = vmul.f32 %v456, %v456
      %v750 = vmul.f32 %v461, %v461
      %v751 = vmul.f32 %v464, %v464
      %v752 = vmul.f32 %v469, %v469
      %v753 = vmul.f32 %v472, %v472
      %v754 = vmul.f32 %v477, %v477
      %v755 = vmul.f32 %v480, %v480
      %v756 = vmul.f32 %v485, %v485
      %v757 = vmul.f32 %v488, %v488
      %v758 = vmul.f32 %v493, %v493
      %v759 = vmul.f32 %v496, %v496
      %v760 = vmul.f32 %v501, %v501
      %v761 = vmul.f32 %v504, %v504
      %v762 = vmul.f32 %v509, %v509
      %v763 = vmul.f32 %v512, %v512
      %v764 = vmul.f32 %v517, %v517
      %v765 = vmul.f32 %v520, %v520
      %v766 = vmul.f32 %v525, %v525
      %v767 = vmul.f32 %v528, %v528
      %v768 = vmul.f32 %v533, %v533
      %v769 = vmul.f32 %v536, %v536
      %v770 = vadd.f32 %v738, %v739
      %v771 = vadd.f32 %v770, %v740
      %v772 = vadd.f32 %v771, %v741
      %v773 = vadd.f32 %v772, %v742
      %v774 = vadd.f32 %v773, %v743
      %v775 = vadd.f32 %v774, %v744
      %v776 = vadd.f32 %v775, %v745
      %v777 = vadd.f32 %v776, %v746
      %v778 = vadd.f32 %v777, %v747
      %v779 = vadd.f32 %v778, %v748
      %v780 = vadd.f32 %v779, %v749
      %v781 = vadd.f32 %v780, %v750
      %v782 = vadd.f32 %v781, %v751
      %v783 = vadd.f32 %v782, %v752
      %v784 = vadd.f32 %v783, %v753
      %v785 = vadd.f32 %v784, %v754
      %v786 = vadd.f32 %v785, %v755
      %v787 = vadd.f32 %v786, %v756
      %v788 = vadd.f32 %v787, %v757
      %v789 = vadd.f32 %v788, %v758
      %v790 = vadd.f32 %v789, %v759
      %v791 = vadd.f32 %v790, %v760
      %v792 = vadd.f32 %v791, %v761
      %v793 = vadd.f32 %v792, %v762
      %v794 = vadd.f32 %v793, %v763
      %v795 = vadd.f32 %v794, %v764
      %v796 = vadd.f32 %v795, %v765
      %v797 = vadd.f32 %v796, %v766
      %v798 = vadd.f32 %v797, %v767
      %v799 = vadd.f32 %v798, %v768
      %v800 = vadd.f32 %v799, %v769
      %v801 = vrot.slane %v800, 4
      %v802 = vadd.f32 %v800, %v801
      %v803 = vrot.slane %v802, 2
      %v804 = vadd.f32 %v802, %v803
      %v805 = vrot.slane %v804, 1
      %v806 = vadd.f32 %v804, %v805
      %807 = vst [vmem:[%s184 + $0x1] sm:$0x1] %v806
      %s808 = smul.u32 32, %s15
      %p809 = scmp.lt.s32.totalorder %s808, 63
      %s810 = scalar_select %p809, %s808, 63
      %s811 = smul.addr %s810, 4
      %s812 = scalar_lea.vmem %s2, %s811
      %p813 = scmp.lt.s32.totalorder %s15, 1
      %s814 = scalar_select %p813, %s15, 1
      %s815 = smul.addr %s814, 8
      %s816 = scalar_lea.vmem %s3, %s815
      // Predicated region
      $region29: #{basic_block_forward.4} parent=27 // pred_check
        %p817 = pneg %p80
      $region30: #{basic_block_forward.4} parent=27 // pred_check_branch
        %819 = sbr.rel (%p817) target = $region32
      $region31: #{basic_block_forward.4} parent=27 // pred_region
        %s820 = smul.u32 32, %s15
      $region32: #{basic_block_forward.4} parent=27 // pred_fallthru
        _
      // Predicated region
      $region33: #{basic_block_forward.4} parent=27 // pred_check
        %p821 = pneg %p106
      $region34: #{basic_block_forward.4} parent=27 // pred_check_branch
        %823 = sbr.rel (%p821) target = $region36
      $region35: #{basic_block_forward.4} parent=27 // pred_region
        _
      $region36: #{basic_block_forward.4} parent=27 // pred_fallthru
        _
    $region28: #{basic_block_forward.4} parent=5 // pred_fallthru
      _
    %p824 = scmp.le.s32.totalorder 2, %s10
    // Predicated region
    $region37: #{basic_block_forward.4} parent=5 // pred_check
      %p825 = pneg %p824
    $region38: #{basic_block_forward.4} parent=5 // pred_check_branch
      %827 = sbr.rel (%p825) target = $region40
    $region39: #{basic_block_forward.4} parent=5 // pred_region
      %s828 = ssub.s32 %s10, 2
      // Predicated region
      $region41: #{basic_block_forward.4} parent=39 // pred_check
        %p829 = pneg %p86
      $region42: #{basic_block_forward.4} parent=39 // pred_check_branch
        %831 = sbr.rel (%p829) target = $region44
      $region43: #{basic_block_forward.4} parent=39 // pred_region
        %s832 = smul.u32 32, %s16
        %p833 = scmp.lt.s32.totalorder %s832, 63
        %s834 = scalar_select %p833, %s832, 63
        %s835 = smul.addr %s834, 4
        %s836 = scalar_lea.vmem %s2, %s835
      $region44: #{basic_block_forward.4} parent=39 // pred_fallthru
        _
      // Predicated region
      $region45: #{basic_block_forward.4} parent=39 // pred_check
        %p837 = pneg %p112
      $region46: #{basic_block_forward.4} parent=39 // pred_check_branch
        %839 = sbr.rel (%p837) target = $region48
      $region47: #{basic_block_forward.4} parent=39 // pred_region
        %p840 = scmp.lt.s32.totalorder %s16, 1
        %s841 = scalar_select %p840, %s16, 1
        %s842 = smul.addr %s841, 8
        %s843 = scalar_lea.vmem %s3, %s842
      $region48: #{basic_block_forward.4} parent=39 // pred_fallthru
        _
    $region40: #{basic_block_forward.4} parent=5 // pred_fallthru
      _
  $region6: #{basic_block_forward.4} parent=0 // loop_footer
    %s14 = sadd.s32 1, %s10
  $region7: #{basic_block_forward.4} parent=0 // loop_footer_branch
    %9 = sbr.rel target = $region3
  $region8: #{basic_block_forward.4} parent=0 // loop_exit
    _

// kernel: basic_block_forward.7
$region0: #{basic_block_forward.7}
  #allocation0 [shape = 'u32[]', space=smem, size = 0x4, offset = 0x4, fixed_abs, tag = 'smem constant byte address 0x4 - core index']
  #allocation1 [shape = 'u32[144,128]{1,0:T(1,128)}', space=vmem, size = 0x12000, scoped, tag = 'internal scratch']
  %s0 = inlined_call_operand.vmem [shape: bf16[512,128], index: 0, kind: input, shape index: {}]
  %s1 = inlined_call_operand.vmem [shape: f32[1,128], index: 1, kind: input, shape index: {}]
  %s2 = inlined_call_operand.vmem [shape: f32[1,128], index: 2, kind: input, shape index: {}]
  %s3 = inlined_call_operand.vmem [shape: bf16[512,128], index: 3, kind: input, shape index: {}]
  %s4 = inlined_call_operand.vmem [shape: f32[1,128], index: 4, kind: input, shape index: {}]
  %s5 = inlined_call_operand.vmem [shape: f32[1,128], index: 5, kind: input, shape index: {}]
  %s6 = inlined_call_operand.vmem [shape: f32[512,128], index: 6, kind: output, shape index: {}]
  %s7 = sld [smem:[#allocation0]]
  $region57: #{basic_block_forward.7} parent=0
    _
  %s9 = ssub.s32 1, %s7
  %s10 = scalar_select 0, %s9, %s7
  loop: start=0, step=1, limit=4
  $region2: #{basic_block_forward.7} parent=0 // loop_pre_header
    _
  $region3: #{basic_block_forward.7} parent=0 // loop_header
    %s12 = sphi 0, %s16
    %p13 = scmp.ge.s32.totalorder %s12, 4
    %s22 = sphi 0, %s24
    %s25 = sphi 0, %s22
    %s26 = sphi 0, %s25
    %s42 = sphi 0, %s26
    %s46 = sphi 0, %s46
    %s48 = sphi 0, %s46
    %s49 = sphi 0, %s48
    %s63 = sphi 0, %s49
    %s67 = sphi 0, %s67
    %s69 = sphi 0, %s67
    %s70 = sphi 0, %s69
    %s84 = sphi 0, %s70
    %s90 = sphi 0, %s92
    %s93 = sphi 0, %s90
    %s94 = sphi 0, %s93
    %s110 = sphi 0, %s94
    %s114 = sphi 0, %s114
    %s116 = sphi 0, %s114
    %s117 = sphi 0, %s116
    %s131 = sphi 0, %s117
    %s135 = sphi 0, %s135
    %s137 = sphi 0, %s135
    %s138 = sphi 0, %s137
    %s152 = sphi 0, %s138
    %s158 = sphi 0, %s160
    %s161 = sphi 0, %s158
    %s162 = sphi 0, %s161
    %s178 = sphi 0, %s162
  $region4: #{basic_block_forward.7} parent=0 // loop_header_branch
    %15 = sbr.rel (%p13) target = $region8
  $region5: #{basic_block_forward.7} parent=0 // loop_body
    %s17 = ssub.s32 %s12, 1
    %s18 = ssub.s32 %s12, 2
    %s19 = sadd.s32 %s12, 1
    %s20 = ssub.s32 %s12, %s19
    %p21 = scmp.eq.s32.totalorder %s20, 0
    %s23 = sadd.s32 %s22, 1
    %s24 = scalar_select %p21, %s22, %s23
    %p27 = pneg %p21
    %p28 = scmp.eq.s32.totalorder %s12, 1
    %p29 = por %p27, %p28
    %p30 = scmp.ne.s32.totalorder %s22, %s25
    %p31 = scmp.eq.s32.totalorder %s12, 0
    %p32 = por %p30, %p31
    %p33 = scmp.ne.s32.totalorder %s22, %s25
    %p34 = scmp.eq.s32.totalorder %s17, 1
    %p35 = por %p33, %p34
    %p36 = scmp.ne.s32.totalorder %s25, %s26
    %p37 = scmp.eq.s32.totalorder %s17, 0
    %p38 = por %p36, %p37
    %p39 = scmp.ne.s32.totalorder %s25, %s26
    %p40 = scmp.eq.s32.totalorder %s18, 1
    %p41 = por %p39, %p40
    %p43 = scmp.ne.s32.totalorder %s26, %s42
    %p44 = scmp.eq.s32.totalorder %s18, 0
    %p45 = por %p43, %p44
    %s47 = sadd.s32 %s46, 1
    %p50 = scmp.eq.s32.totalorder %s12, 1
    %p51 = scmp.ne.s32.totalorder %s46, %s48
    %p52 = scmp.eq.s32.totalorder %s12, 0
    %p53 = por %p51, %p52
    %p54 = scmp.ne.s32.totalorder %s46, %s48
    %p55 = scmp.eq.s32.totalorder %s17, 1
    %p56 = por %p54, %p55
    %p57 = scmp.ne.s32.totalorder %s48, %s49
    %p58 = scmp.eq.s32.totalorder %s17, 0
    %p59 = por %p57, %p58
    %p60 = scmp.ne.s32.totalorder %s48, %s49
    %p61 = scmp.eq.s32.totalorder %s18, 1
    %p62 = por %p60, %p61
    %p64 = scmp.ne.s32.totalorder %s49, %s63
    %p65 = scmp.eq.s32.totalorder %s18, 0
    %p66 = por %p64, %p65
    %s68 = sadd.s32 %s67, 1
    %p71 = scmp.eq.s32.totalorder %s12, 1
    %p72 = scmp.ne.s32.totalorder %s67, %s69
    %p73 = scmp.eq.s32.totalorder %s12, 0
    %p74 = por %p72, %p73
    %p75 = scmp.ne.s32.totalorder %s67, %s69
    %p76 = scmp.eq.s32.totalorder %s17, 1
    %p77 = por %p75, %p76
    %p78 = scmp.ne.s32.totalorder %s69, %s70
    %p79 = scmp.eq.s32.totalorder %s17, 0
    %p80 = por %p78, %p79
    %p81 = scmp.ne.s32.totalorder %s69, %s70
    %p82 = scmp.eq.s32.totalorder %s18, 1
    %p83 = por %p81, %p82
    %p85 = scmp.ne.s32.totalorder %s70, %s84
    %p86 = scmp.eq.s32.totalorder %s18, 0
    %p87 = por %p85, %p86
    %s88 = ssub.s32 %s12, %s19
    %p89 = scmp.eq.s32.totalorder %s88, 0
    %s91 = sadd.s32 %s90, 1
    %s92 = scalar_select %p89, %s90, %s91
    %p95 = pneg %p89
    %p96 = scmp.eq.s32.totalorder %s12, 1
    %p97 = por %p95, %p96
    %p98 = scmp.ne.s32.totalorder %s90, %s93
    %p99 = scmp.eq.s32.totalorder %s12, 0
    %p100 = por %p98, %p99
    %p101 = scmp.ne.s32.totalorder %s90, %s93
    %p102 = scmp.eq.s32.totalorder %s17, 1
    %p103 = por %p101, %p102
    %p104 = scmp.ne.s32.totalorder %s93, %s94
    %p105 = scmp.eq.s32.totalorder %s17, 0
    %p106 = por %p104, %p105
    %p107 = scmp.ne.s32.totalorder %s93, %s94
    %p108 = scmp.eq.s32.totalorder %s18, 1
    %p109 = por %p107, %p108
    %p111 = scmp.ne.s32.totalorder %s94, %s110
    %p112 = scmp.eq.s32.totalorder %s18, 0
    %p113 = por %p111, %p112
    %s115 = sadd.s32 %s114, 1
    %p118 = scmp.eq.s32.totalorder %s12, 1
    %p119 = scmp.ne.s32.totalorder %s114, %s116
    %p120 = scmp.eq.s32.totalorder %s12, 0
    %p121 = por %p119, %p120
    %p122 = scmp.ne.s32.totalorder %s114, %s116
    %p123 = scmp.eq.s32.totalorder %s17, 1
    %p124 = por %p122, %p123
    %p125 = scmp.ne.s32.totalorder %s116, %s117
    %p126 = scmp.eq.s32.totalorder %s17, 0
    %p127 = por %p125, %p126
    %p128 = scmp.ne.s32.totalorder %s116, %s117
    %p129 = scmp.eq.s32.totalorder %s18, 1
    %p130 = por %p128, %p129
    %p132 = scmp.ne.s32.totalorder %s117, %s131
    %p133 = scmp.eq.s32.totalorder %s18, 0
    %p134 = por %p132, %p133
    %s136 = sadd.s32 %s135, 1
    %p139 = scmp.eq.s32.totalorder %s12, 1
    %p140 = scmp.ne.s32.totalorder %s135, %s137
    %p141 = scmp.eq.s32.totalorder %s12, 0
    %p142 = por %p140, %p141
    %p143 = scmp.ne.s32.totalorder %s135, %s137
    %p144 = scmp.eq.s32.totalorder %s17, 1
    %p145 = por %p143, %p144
    %p146 = scmp.ne.s32.totalorder %s137, %s138
    %p147 = scmp.eq.s32.totalorder %s17, 0
    %p148 = por %p146, %p147
    %p149 = scmp.ne.s32.totalorder %s137, %s138
    %p150 = scmp.eq.s32.totalorder %s18, 1
    %p151 = por %p149, %p150
    %p153 = scmp.ne.s32.totalorder %s138, %s152
    %p154 = scmp.eq.s32.totalorder %s18, 0
    %p155 = por %p153, %p154
    %s156 = ssub.s32 %s12, %s19
    %p157 = scmp.eq.s32.totalorder %s156, 0
    %s159 = sadd.s32 %s158, 1
    %s160 = scalar_select %p157, %s158, %s159
    %p163 = pneg %p157
    %p164 = scmp.eq.s32.totalorder %s12, 1
    %p165 = por %p163, %p164
    %p166 = scmp.ne.s32.totalorder %s158, %s161
    %p167 = scmp.eq.s32.totalorder %s12, 0
    %p168 = por %p166, %p167
    %p169 = scmp.ne.s32.totalorder %s158, %s161
    %p170 = scmp.eq.s32.totalorder %s17, 1
    %p171 = por %p169, %p170
    %p172 = scmp.ne.s32.totalorder %s161, %s162
    %p173 = scmp.eq.s32.totalorder %s17, 0
    %p174 = por %p172, %p173
    %p175 = scmp.ne.s32.totalorder %s161, %s162
    %p176 = scmp.eq.s32.totalorder %s18, 1
    %p177 = por %p175, %p176
    %p179 = scmp.ne.s32.totalorder %s162, %s178
    %p180 = scmp.eq.s32.totalorder %s18, 0
    %p181 = por %p179, %p180
    %p182 = scmp.le.s32.totalorder 1, %s12
    %p183 = scmp.lt.s32.totalorder %s12, 3
    %p184 = pnand %p182, %p183
    %p185 = pneg %p184
    // Predicated region
    $region9: #{basic_block_forward.7} parent=5 // pred_check
      _
    $region10: #{basic_block_forward.7} parent=5 // pred_check_branch
      %187 = sbr.rel (%p184) target = $region12
    $region11: #{basic_block_forward.7} parent=5 // pred_region
      %s188 = ssub.s32 %s12, 1
      // Predicated region
      $region13: #{basic_block_forward.7} parent=11 // pred_check
        %p189 = pneg %p59
      $region14: #{basic_block_forward.7} parent=11 // pred_check_branch
        %191 = sbr.rel (%p189) target = $region16
      $region15: #{basic_block_forward.7} parent=11 // pred_region
        _
      $region16: #{basic_block_forward.7} parent=11 // pred_fallthru
        _
      // Predicated region
      $region17: #{basic_block_forward.7} parent=11 // pred_check
        %p192 = pneg %p80
      $region18: #{basic_block_forward.7} parent=11 // pred_check_branch
        %194 = sbr.rel (%p192) target = $region20
      $region19: #{basic_block_forward.7} parent=11 // pred_region
        _
      $region20: #{basic_block_forward.7} parent=11 // pred_fallthru
        _
      // Predicated region
      $region21: #{basic_block_forward.7} parent=11 // pred_check
        %p195 = pneg %p127
      $region22: #{basic_block_forward.7} parent=11 // pred_check_branch
        %197 = sbr.rel (%p195) target = $region24
      $region23: #{basic_block_forward.7} parent=11 // pred_region
        _
      $region24: #{basic_block_forward.7} parent=11 // pred_fallthru
        _
      // Predicated region
      $region25: #{basic_block_forward.7} parent=11 // pred_check
        %p198 = pneg %p148
      $region26: #{basic_block_forward.7} parent=11 // pred_check_branch
        %200 = sbr.rel (%p198) target = $region28
      $region27: #{basic_block_forward.7} parent=11 // pred_region
        _
      $region28: #{basic_block_forward.7} parent=11 // pred_fallthru
        _
    $region12: #{basic_block_forward.7} parent=5 // pred_fallthru
      _
    %p201 = scmp.lt.s32.totalorder %s12, 2
    // Predicated region
    $region29: #{basic_block_forward.7} parent=5 // pred_check
      %p202 = pneg %p201
    $region30: #{basic_block_forward.7} parent=5 // pred_check_branch
      %204 = sbr.rel (%p202) target = $region32
    $region31: #{basic_block_forward.7} parent=5 // pred_region
      // Predicated region
      $region33: #{basic_block_forward.7} parent=31 // pred_check
        %p205 = pneg %p32
      $region34: #{basic_block_forward.7} parent=31 // pred_check_branch
        %207 = sbr.rel (%p205) target = $region36
      $region35: #{basic_block_forward.7} parent=31 // pred_region
        %s208 = smul.u32 32, %s12
        %p209 = scmp.lt.s32.totalorder %s208, 63
        %s210 = scalar_select %p209, %s208, 63
        %s211 = smul.addr %s210, 4
        %s212 = scalar_lea.vmem %s0, %s211
        %s213 = smul.u32 32, %s12
      $region36: #{basic_block_forward.7} parent=31 // pred_fallthru
        _
      // Predicated region
      $region37: #{basic_block_forward.7} parent=31 // pred_check
        %p214 = pneg %p100
      $region38: #{basic_block_forward.7} parent=31 // pred_check_branch
        %216 = sbr.rel (%p214) target = $region40
      $region39: #{basic_block_forward.7} parent=31 // pred_region
        %s217 = smul.u32 32, %s12
        %p218 = scmp.lt.s32.totalorder %s217, 63
        %s219 = scalar_select %p218, %s217, 63
        %s220 = smul.addr %s219, 4
        %s221 = scalar_lea.vmem %s3, %s220
        %s222 = smul.u32 32, %s12
      $region40: #{basic_block_forward.7} parent=31 // pred_fallthru
        _
    $region32: #{basic_block_forward.7} parent=5 // pred_fallthru
      _
    %p223 = scmp.le.s32.totalorder 1, %s12
    %p224 = scmp.lt.s32.totalorder %s12, 3
    %p225 = pnand %p223, %p224
    %p226 = pneg %p225
    // Predicated region
    $region41: #{basic_block_forward.7} parent=5 // pred_check
      _
    $region42: #{basic_block_forward.7} parent=5 // pred_check_branch
      %228 = sbr.rel (%p225) target = $region44
    $region43: #{basic_block_forward.7} parent=5 // pred_region
      %s229 = ssub.s32 %s12, 1
      %s230 = smul.u32 32, %s17
      %p231 = scmp.lt.s32.totalorder %s230, 63
      %s232 = scalar_select %p231, %s230, 63
      %s233 = smul.addr %s232, 4
      %s234 = scalar_lea.vmem %s0, %s233
      %p235 = pneg %p38
      %p236 = pneg %p35
      %p237 = pneg %p59
      %p238 = pneg %p56
      %p239 = pneg %p80
      %p240 = pneg %p77
      %s241 = smul.u32 32, %s17
      %p242 = scmp.lt.s32.totalorder %s241, 63
      %s243 = scalar_select %p242, %s241, 63
      %s244 = smul.addr %s243, 4
      %s245 = scalar_lea.vmem %s3, %s244
      %p246 = pneg %p106
      %p247 = pneg %p103
      %p248 = pneg %p127
      %p249 = pneg %p124
      %p250 = pneg %p148
      %p251 = pneg %p145
      %p252 = pneg %p174
      %p253 = pneg %p171
      %s254 = smul.u32 32, %s17
      %p255 = scmp.lt.s32.totalorder %s254, 63
      %s256 = scalar_select %p255, %s254, 63
      %s257 = smul.addr %s256, 8
      %s258 = scalar_lea.vmem %s6, %s257
      %s259 = smul.u32 32, %s17
      %p260 = scmp.lt.s32.totalorder %s259, 63
      %s261 = scalar_select %p260, %s259, 63
      %s262 = smul.addr %s261, 4
      %s263 = scalar_lea.vmem %s0, %s262
      %s264 = smul.u32 32, %s17
      %s265 = smul.u32 32, %s17
      %p266 = scmp.lt.s32.totalorder %s265, 63
      %s267 = scalar_select %p266, %s265, 63
      %s268 = smul.addr %s267, 4
      %s269 = scalar_lea.vmem %s3, %s268
      %s270 = smul.u32 32, %s17
      %s271 = smul.u32 32, %s17
      %p272 = scmp.lt.s32.totalorder %s271, 63
      %s273 = scalar_select %p272, %s271, 63
      %s274 = smul.addr %s273, 8
      %s275 = scalar_lea.vmem %s6, %s274
      %s276 = smul.u32 32, %s17
      %v277 = vld [vmem:[%s263] sm:$0xf]
      %v278 = vld [vmem:[%s263 + $0x4] sm:$0xf]
      %v279 = vld [vmem:[%s263 + $0x8] sm:$0xf]
      %v280 = vld [vmem:[%s263 + $0xc] sm:$0xf]
      %v281 = vld [vmem:[%s263 + $0x10] sm:$0xf]
      %v282 = vld [vmem:[%s263 + $0x14] sm:$0xf]
      %v283 = vld [vmem:[%s263 + $0x18] sm:$0xf]
      %v284 = vld [vmem:[%s263 + $0x1c] sm:$0xf]
      %v285 = vld [vmem:[%s263 + $0x20] sm:$0xf]
      %v286 = vld [vmem:[%s263 + $0x24] sm:$0xf]
      %v287 = vld [vmem:[%s263 + $0x28] sm:$0xf]
      %v288 = vld [vmem:[%s263 + $0x2c] sm:$0xf]
      %v289 = vld [vmem:[%s263 + $0x30] sm:$0xf]
      %v290 = vld [vmem:[%s263 + $0x34] sm:$0xf]
      %v291 = vld [vmem:[%s263 + $0x38] sm:$0xf]
      %v292 = vld [vmem:[%s263 + $0x3c] sm:$0xf]
      %v293 = vld [vmem:[%s263 + $0x40] sm:$0xf]
      %v294 = vld [vmem:[%s263 + $0x44] sm:$0xf]
      %v295 = vld [vmem:[%s263 + $0x48] sm:$0xf]
      %v296 = vld [vmem:[%s263 + $0x4c] sm:$0xf]
      %v297 = vld [vmem:[%s263 + $0x50] sm:$0xf]
      %v298 = vld [vmem:[%s263 + $0x54] sm:$0xf]
      %v299 = vld [vmem:[%s263 + $0x58] sm:$0xf]
      %v300 = vld [vmem:[%s263 + $0x5c] sm:$0xf]
      %v301 = vld [vmem:[%s263 + $0x60] sm:$0xf]
      %v302 = vld [vmem:[%s263 + $0x64] sm:$0xf]
      %v303 = vld [vmem:[%s263 + $0x68] sm:$0xf]
      %v304 = vld [vmem:[%s263 + $0x6c] sm:$0xf]
      %v305 = vld [vmem:[%s263 + $0x70] sm:$0xf]
      %v306 = vld [vmem:[%s263 + $0x74] sm:$0xf]
      %v307 = vld [vmem:[%s263 + $0x78] sm:$0xf]
      %v308 = vld [vmem:[%s263 + $0x7c] sm:$0xf]
      %v309 = vunpack.c.l.bf16 %v277
      %v310 = vunpack.c.l.bf16 %v278
      %v311 = vunpack.c.l.bf16 %v279
      %v312 = vunpack.c.l.bf16 %v280
      %v313 = vunpack.c.l.bf16 %v281
      %v314 = vunpack.c.l.bf16 %v282
      %v315 = vunpack.c.l.bf16 %v283
      %v316 = vunpack.c.l.bf16 %v284
      %v317 = vunpack.c.l.bf16 %v285
      %v318 = vunpack.c.l.bf16 %v286
      %v319 = vunpack.c.l.bf16 %v287
      %v320 = vunpack.c.l.bf16 %v288
      %v321 = vunpack.c.l.bf16 %v289
      %v322 = vunpack.c.l.bf16 %v290
      %v323 = vunpack.c.l.bf16 %v291
      %v324 = vunpack.c.l.bf16 %v292
      %v325 = vunpack.c.l.bf16 %v293
      %v326 = vunpack.c.l.bf16 %v294
      %v327 = vunpack.c.l.bf16 %v295
      %v328 = vunpack.c.l.bf16 %v296
      %v329 = vunpack.c.l.bf16 %v297
      %v330 = vunpack.c.l.bf16 %v298
      %v331 = vunpack.c.l.bf16 %v299
      %v332 = vunpack.c.l.bf16 %v300
      %v333 = vunpack.c.l.bf16 %v301
      %v334 = vunpack.c.l.bf16 %v302
      %v335 = vunpack.c.l.bf16 %v303
      %v336 = vunpack.c.l.bf16 %v304
      %v337 = vunpack.c.l.bf16 %v305
      %v338 = vunpack.c.l.bf16 %v306
      %v339 = vunpack.c.l.bf16 %v307
      %v340 = vunpack.c.l.bf16 %v308
      %v341 = vld [vmem:[%s1] sm:$0x1]
      %v343 = vlaneseq
      %v344 = vshrl.u32 %v343, 7
      %v345 = vsub.s32 0, %v344
      %v346 = vrot.slane %v341, %v345
      %v348 = vmul.f32 %v309, %v346
      %v349 = vmul.f32 %v310, %v346
      %v350 = vmul.f32 %v311, %v346
      %v351 = vmul.f32 %v312, %v346
      %v352 = vmul.f32 %v313, %v346
      %v353 = vmul.f32 %v314, %v346
      %v354 = vmul.f32 %v315, %v346
      %v355 = vmul.f32 %v316, %v346
      %v356 = vmul.f32 %v317, %v346
      %v357 = vmul.f32 %v318, %v346
      %v358 = vmul.f32 %v319, %v346
      %v359 = vmul.f32 %v320, %v346
      %v360 = vmul.f32 %v321, %v346
      %v361 = vmul.f32 %v322, %v346
      %v362 = vmul.f32 %v323, %v346
      %v363 = vmul.f32 %v324, %v346
      %v364 = vmul.f32 %v325, %v346
      %v365 = vmul.f32 %v326, %v346
      %v366 = vmul.f32 %v327, %v346
      %v367 = vmul.f32 %v328, %v346
      %v368 = vmul.f32 %v329, %v346
      %v369 = vmul.f32 %v330, %v346
      %v370 = vmul.f32 %v331, %v346
      %v371 = vmul.f32 %v332, %v346
      %v372 = vmul.f32 %v333, %v346
      %v373 = vmul.f32 %v334, %v346
      %v374 = vmul.f32 %v335, %v346
      %v375 = vmul.f32 %v336, %v346
      %v376 = vmul.f32 %v337, %v346
      %v377 = vmul.f32 %v338, %v346
      %v378 = vmul.f32 %v339, %v346
      %v379 = vmul.f32 %v340, %v346
      %v380 = vld [vmem:[%s2] sm:$0x1]
      %v382 = vlaneseq
      %v383 = vshrl.u32 %v382, 7
      %v384 = vsub.s32 0, %v383
      %v385 = vrot.slane %v380, %v384
      %v387 = vadd.f32 %v348, %v385
      %v388 = vadd.f32 %v349, %v385
      %v389 = vadd.f32 %v350, %v385
      %v390 = vadd.f32 %v351, %v385
      %v391 = vadd.f32 %v352, %v385
      %v392 = vadd.f32 %v353, %v385
      %v393 = vadd.f32 %v354, %v385
      %v394 = vadd.f32 %v355, %v385
      %v395 = vadd.f32 %v356, %v385
      %v396 = vadd.f32 %v357, %v385
      %v397 = vadd.f32 %v358, %v385
      %v398 = vadd.f32 %v359, %v385
      %v399 = vadd.f32 %v360, %v385
      %v400 = vadd.f32 %v361, %v385
      %v401 = vadd.f32 %v362, %v385
      %v402 = vadd.f32 %v363, %v385
      %v403 = vadd.f32 %v364, %v385
      %v404 = vadd.f32 %v365, %v385
      %v405 = vadd.f32 %v366, %v385
      %v406 = vadd.f32 %v367, %v385
      %v407 = vadd.f32 %v368, %v385
      %v408 = vadd.f32 %v369, %v385
      %v409 = vadd.f32 %v370, %v385
      %v410 = vadd.f32 %v371, %v385
      %v411 = vadd.f32 %v372, %v385
      %v412 = vadd.f32 %v373, %v385
      %v413 = vadd.f32 %v374, %v385
      %v414 = vadd.f32 %v375, %v385
      %v415 = vadd.f32 %v376, %v385
      %v416 = vadd.f32 %v377, %v385
      %v417 = vadd.f32 %v378, %v385
      %v418 = vadd.f32 %v379, %v385
      %v419 = vld [vmem:[%s269] sm:$0xf]
      %v420 = vld [vmem:[%s269 + $0x4] sm:$0xf]
      %v421 = vld [vmem:[%s269 + $0x8] sm:$0xf]
      %v422 = vld [vmem:[%s269 + $0xc] sm:$0xf]
      %v423 = vld [vmem:[%s269 + $0x10] sm:$0xf]
      %v424 = vld [vmem:[%s269 + $0x14] sm:$0xf]
      %v425 = vld [vmem:[%s269 + $0x18] sm:$0xf]
      %v426 = vld [vmem:[%s269 + $0x1c] sm:$0xf]
      %v427 = vld [vmem:[%s269 + $0x20] sm:$0xf]
      %v428 = vld [vmem:[%s269 + $0x24] sm:$0xf]
      %v429 = vld [vmem:[%s269 + $0x28] sm:$0xf]
      %v430 = vld [vmem:[%s269 + $0x2c] sm:$0xf]
      %v431 = vld [vmem:[%s269 + $0x30] sm:$0xf]
      %v432 = vld [vmem:[%s269 + $0x34] sm:$0xf]
      %v433 = vld [vmem:[%s269 + $0x38] sm:$0xf]
      %v434 = vld [vmem:[%s269 + $0x3c] sm:$0xf]
      %v435 = vld [vmem:[%s269 + $0x40] sm:$0xf]
      %v436 = vld [vmem:[%s269 + $0x44] sm:$0xf]
      %v437 = vld [vmem:[%s269 + $0x48] sm:$0xf]
      %v438 = vld [vmem:[%s269 + $0x4c] sm:$0xf]
      %v439 = vld [vmem:[%s269 + $0x50] sm:$0xf]
      %v440 = vld [vmem:[%s269 + $0x54] sm:$0xf]
      %v441 = vld [vmem:[%s269 + $0x58] sm:$0xf]
      %v442 = vld [vmem:[%s269 + $0x5c] sm:$0xf]
      %v443 = vld [vmem:[%s269 + $0x60] sm:$0xf]
      %v444 = vld [vmem:[%s269 + $0x64] sm:$0xf]
      %v445 = vld [vmem:[%s269 + $0x68] sm:$0xf]
      %v446 = vld [vmem:[%s269 + $0x6c] sm:$0xf]
      %v447 = vld [vmem:[%s269 + $0x70] sm:$0xf]
      %v448 = vld [vmem:[%s269 + $0x74] sm:$0xf]
      %v449 = vld [vmem:[%s269 + $0x78] sm:$0xf]
      %v450 = vld [vmem:[%s269 + $0x7c] sm:$0xf]
      %v451 = vunpack.c.l.bf16 %v419
      %v452 = vunpack.c.l.bf16 %v420
      %v453 = vunpack.c.l.bf16 %v421
      %v454 = vunpack.c.l.bf16 %v422
      %v455 = vunpack.c.l.bf16 %v423
      %v456 = vunpack.c.l.bf16 %v424
      %v457 = vunpack.c.l.bf16 %v425
      %v458 = vunpack.c.l.bf16 %v426
      %v459 = vunpack.c.l.bf16 %v427
      %v460 = vunpack.c.l.bf16 %v428
      %v461 = vunpack.c.l.bf16 %v429
      %v462 = vunpack.c.l.bf16 %v430
      %v463 = vunpack.c.l.bf16 %v431
      %v464 = vunpack.c.l.bf16 %v432
      %v465 = vunpack.c.l.bf16 %v433
      %v466 = vunpack.c.l.bf16 %v434
      %v467 = vunpack.c.l.bf16 %v435
      %v468 = vunpack.c.l.bf16 %v436
      %v469 = vunpack.c.l.bf16 %v437
      %v470 = vunpack.c.l.bf16 %v438
      %v471 = vunpack.c.l.bf16 %v439
      %v472 = vunpack.c.l.bf16 %v440
      %v473 = vunpack.c.l.bf16 %v441
      %v474 = vunpack.c.l.bf16 %v442
      %v475 = vunpack.c.l.bf16 %v443
      %v476 = vunpack.c.l.bf16 %v444
      %v477 = vunpack.c.l.bf16 %v445
      %v478 = vunpack.c.l.bf16 %v446
      %v479 = vunpack.c.l.bf16 %v447
      %v480 = vunpack.c.l.bf16 %v448
      %v481 = vunpack.c.l.bf16 %v449
      %v482 = vunpack.c.l.bf16 %v450
      %v483 = vld [vmem:[%s4] sm:$0x1]
      %v485 = vlaneseq
      %v486 = vshrl.u32 %v485, 7
      %v487 = vsub.s32 0, %v486
      %v488 = vrot.slane %v483, %v487
      %v490 = vmul.f32 %v451, %v488
      %v491 = vmul.f32 %v452, %v488
      %v492 = vmul.f32 %v453, %v488
      %v493 = vmul.f32 %v454, %v488
      %v494 = vmul.f32 %v455, %v488
      %v495 = vmul.f32 %v456, %v488
      %v496 = vmul.f32 %v457, %v488
      %v497 = vmul.f32 %v458, %v488
      %v498 = vmul.f32 %v459, %v488
      %v499 = vmul.f32 %v460, %v488
      %v500 = vmul.f32 %v461, %v488
      %v501 = vmul.f32 %v462, %v488
      %v502 = vmul.f32 %v463, %v488
      %v503 = vmul.f32 %v464, %v488
      %v504 = vmul.f32 %v465, %v488
      %v505 = vmul.f32 %v466, %v488
      %v506 = vmul.f32 %v467, %v488
      %v507 = vmul.f32 %v468, %v488
      %v508 = vmul.f32 %v469, %v488
      %v509 = vmul.f32 %v470, %v488
      %v510 = vmul.f32 %v471, %v488
      %v511 = vmul.f32 %v472, %v488
      %v512 = vmul.f32 %v473, %v488
      %v513 = vmul.f32 %v474, %v488
      %v514 = vmul.f32 %v475, %v488
      %v515 = vmul.f32 %v476, %v488
      %v516 = vmul.f32 %v477, %v488
      %v517 = vmul.f32 %v478, %v488
      %v518 = vmul.f32 %v479, %v488
      %v519 = vmul.f32 %v480, %v488
      %v520 = vmul.f32 %v481, %v488
      %v521 = vmul.f32 %v482, %v488
      %v522 = vld [vmem:[%s5] sm:$0x1]
      %v524 = vlaneseq
      %v525 = vshrl.u32 %v524, 7
      %v526 = vsub.s32 0, %v525
      %v527 = vrot.slane %v522, %v526
      %v529 = vadd.f32 %v490, %v527
      %v530 = vadd.f32 %v491, %v527
      %v531 = vadd.f32 %v492, %v527
      %v532 = vadd.f32 %v493, %v527
      %v533 = vadd.f32 %v494, %v527
      %v534 = vadd.f32 %v495, %v527
      %v535 = vadd.f32 %v496, %v527
      %v536 = vadd.f32 %v497, %v527
      %v537 = vadd.f32 %v498, %v527
      %v538 = vadd.f32 %v499, %v527
      %v539 = vadd.f32 %v500, %v527
      %v540 = vadd.f32 %v501, %v527
      %v541 = vadd.f32 %v502, %v527
      %v542 = vadd.f32 %v503, %v527
      %v543 = vadd.f32 %v504, %v527
      %v544 = vadd.f32 %v505, %v527
      %v545 = vadd.f32 %v506, %v527
      %v546 = vadd.f32 %v507, %v527
      %v547 = vadd.f32 %v508, %v527
      %v548 = vadd.f32 %v509, %v527
      %v549 = vadd.f32 %v510, %v527
      %v550 = vadd.f32 %v511, %v527
      %v551 = vadd.f32 %v512, %v527
      %v552 = vadd.f32 %v513, %v527
      %v553 = vadd.f32 %v514, %v527
      %v554 = vadd.f32 %v515, %v527
      %v555 = vadd.f32 %v516, %v527
      %v556 = vadd.f32 %v517, %v527
      %v557 = vadd.f32 %v518, %v527
      %v558 = vadd.f32 %v519, %v527
      %v559 = vadd.f32 %v520, %v527
      %v560 = vadd.f32 %v521, %v527
      %v561 = vadd.f32 %v387, %v529
      %v562 = vadd.f32 %v388, %v530
      %v563 = vadd.f32 %v389, %v531
      %v564 = vadd.f32 %v390, %v532
      %v565 = vadd.f32 %v391, %v533
      %v566 = vadd.f32 %v392, %v534
      %v567 = vadd.f32 %v393, %v535
      %v568 = vadd.f32 %v394, %v536
      %v569 = vadd.f32 %v395, %v537
      %v570 = vadd.f32 %v396, %v538
      %v571 = vadd.f32 %v397, %v539
      %v572 = vadd.f32 %v398, %v540
      %v573 = vadd.f32 %v399, %v541
      %v574 = vadd.f32 %v400, %v542
      %v575 = vadd.f32 %v401, %v543
      %v576 = vadd.f32 %v402, %v544
      %v577 = vadd.f32 %v403, %v545
      %v578 = vadd.f32 %v404, %v546
      %v579 = vadd.f32 %v405, %v547
      %v580 = vadd.f32 %v406, %v548
      %v581 = vadd.f32 %v407, %v549
      %v582 = vadd.f32 %v408, %v550
      %v583 = vadd.f32 %v409, %v551
      %v584 = vadd.f32 %v410, %v552
      %v585 = vadd.f32 %v411, %v553
      %v586 = vadd.f32 %v412, %v554
      %v587 = vadd.f32 %v413, %v555
      %v588 = vadd.f32 %v414, %v556
      %v589 = vadd.f32 %v415, %v557
      %v590 = vadd.f32 %v416, %v558
      %v591 = vadd.f32 %v417, %v559
      %v592 = vadd.f32 %v418, %v560
      %v593 = vmax.f32 %v561, 0.0
      %v594 = vmax.f32 %v562, 0.0
      %v595 = vmax.f32 %v563, 0.0
      %v596 = vmax.f32 %v564, 0.0
      %v597 = vmax.f32 %v565, 0.0
      %v598 = vmax.f32 %v566, 0.0
      %v599 = vmax.f32 %v567, 0.0
      %v600 = vmax.f32 %v568, 0.0
      %v601 = vmax.f32 %v569, 0.0
      %v602 = vmax.f32 %v570, 0.0
      %v603 = vmax.f32 %v571, 0.0
      %v604 = vmax.f32 %v572, 0.0
      %v605 = vmax.f32 %v573, 0.0
      %v606 = vmax.f32 %v574, 0.0
      %v607 = vmax.f32 %v575, 0.0
      %v608 = vmax.f32 %v576, 0.0
      %v609 = vmax.f32 %v577, 0.0
      %v610 = vmax.f32 %v578, 0.0
      %v611 = vmax.f32 %v579, 0.0
      %v612 = vmax.f32 %v580, 0.0
      %v613 = vmax.f32 %v581, 0.0
      %v614 = vmax.f32 %v582, 0.0
      %v615 = vmax.f32 %v583, 0.0
      %v616 = vmax.f32 %v584, 0.0
      %v617 = vmax.f32 %v585, 0.0
      %v618 = vmax.f32 %v586, 0.0
      %v619 = vmax.f32 %v587, 0.0
      %v620 = vmax.f32 %v588, 0.0
      %v621 = vmax.f32 %v589, 0.0
      %v622 = vmax.f32 %v590, 0.0
      %v623 = vmax.f32 %v591, 0.0
      %v624 = vmax.f32 %v592, 0.0
      %625 = vst [vmem:[%s275] sm:$0xff] %v593
      %626 = vst [vmem:[%s275 + $0x8] sm:$0xff] %v594
      %627 = vst [vmem:[%s275 + $0x10] sm:$0xff] %v595
      %628 = vst [vmem:[%s275 + $0x18] sm:$0xff] %v596
      %629 = vst [vmem:[%s275 + $0x20] sm:$0xff] %v597
      %630 = vst [vmem:[%s275 + $0x28] sm:$0xff] %v598
      %631 = vst [vmem:[%s275 + $0x30] sm:$0xff] %v599
      %632 = vst [vmem:[%s275 + $0x38] sm:$0xff] %v600
      %633 = vst [vmem:[%s275 + $0x40] sm:$0xff] %v601
      %634 = vst [vmem:[%s275 + $0x48] sm:$0xff] %v602
      %635 = vst [vmem:[%s275 + $0x50] sm:$0xff] %v603
      %636 = vst [vmem:[%s275 + $0x58] sm:$0xff] %v604
      %637 = vst [vmem:[%s275 + $0x60] sm:$0xff] %v605
      %638 = vst [vmem:[%s275 + $0x68] sm:$0xff] %v606
      %639 = vst [vmem:[%s275 + $0x70] sm:$0xff] %v607
      %640 = vst [vmem:[%s275 + $0x78] sm:$0xff] %v608
      %641 = vst [vmem:[%s275 + $0x80] sm:$0xff] %v609
      %642 = vst [vmem:[%s275 + $0x88] sm:$0xff] %v610
      %643 = vst [vmem:[%s275 + $0x90] sm:$0xff] %v611
      %644 = vst [vmem:[%s275 + $0x98] sm:$0xff] %v612
      %645 = vst [vmem:[%s275 + $0xa0] sm:$0xff] %v613
      %646 = vst [vmem:[%s275 + $0xa8] sm:$0xff] %v614
      %647 = vst [vmem:[%s275 + $0xb0] sm:$0xff] %v615
      %648 = vst [vmem:[%s275 + $0xb8] sm:$0xff] %v616
      %649 = vst [vmem:[%s275 + $0xc0] sm:$0xff] %v617
      %650 = vst [vmem:[%s275 + $0xc8] sm:$0xff] %v618
      %651 = vst [vmem:[%s275 + $0xd0] sm:$0xff] %v619
      %652 = vst [vmem:[%s275 + $0xd8] sm:$0xff] %v620
      %653 = vst [vmem:[%s275 + $0xe0] sm:$0xff] %v621
      %654 = vst [vmem:[%s275 + $0xe8] sm:$0xff] %v622
      %655 = vst [vmem:[%s275 + $0xf0] sm:$0xff] %v623
      %656 = vst [vmem:[%s275 + $0xf8] sm:$0xff] %v624
      %s657 = smul.u32 32, %s17
      %p658 = scmp.lt.s32.totalorder %s657, 63
      %s659 = scalar_select %p658, %s657, 63
      %s660 = smul.addr %s659, 8
      %s661 = scalar_lea.vmem %s6, %s660
      // Predicated region
      $region45: #{basic_block_forward.7} parent=43 // pred_check
        %p662 = pneg %p171
      $region46: #{basic_block_forward.7} parent=43 // pred_check_branch
        %664 = sbr.rel (%p662) target = $region48
      $region47: #{basic_block_forward.7} parent=43 // pred_region
        %s665 = smul.u32 32, %s17
      $region48: #{basic_block_forward.7} parent=43 // pred_fallthru
        _
    $region44: #{basic_block_forward.7} parent=5 // pred_fallthru
      _
    %p666 = scmp.le.s32.totalorder 2, %s12
    // Predicated region
    $region49: #{basic_block_forward.7} parent=5 // pred_check
      %p667 = pneg %p666
    $region50: #{basic_block_forward.7} parent=5 // pred_check_branch
      %669 = sbr.rel (%p667) target = $region52
    $region51: #{basic_block_forward.7} parent=5 // pred_region
      %s670 = ssub.s32 %s12, 2
      // Predicated region
      $region53: #{basic_block_forward.7} parent=51 // pred_check
        %p671 = pneg %p177
      $region54: #{basic_block_forward.7} parent=51 // pred_check_branch
        %673 = sbr.rel (%p671) target = $region56
      $region55: #{basic_block_forward.7} parent=51 // pred_region
        %s674 = smul.u32 32, %s18
        %p675 = scmp.lt.s32.totalorder %s674, 63
        %s676 = scalar_select %p675, %s674, 63
        %s677 = smul.addr %s676, 8
        %s678 = scalar_lea.vmem %s6, %s677
      $region56: #{basic_block_forward.7} parent=51 // pred_fallthru
        _
    $region52: #{basic_block_forward.7} parent=5 // pred_fallthru
      _
  $region6: #{basic_block_forward.7} parent=0 // loop_footer
    %s16 = sadd.s32 1, %s12
  $region7: #{basic_block_forward.7} parent=0 // loop_footer_branch
    %11 = sbr.rel target = $region3
  $region8: #{basic_block_forward.7} parent=0 // loop_exit
    _

</llo_original>
